<compile_context>
chip_gen: v6e
topology: v6e:2x2x1
jax: 0.10.0
libtpu: 0.0.40
codegen_flags: <defaults>
</compile_context>

<pallas_src>
import functools

import numpy as np
import jax
import jax.numpy as jnp
from jax import lax
from jax.experimental import pallas as pl
from jax.experimental.pallas import tpu as pltpu

MAXIMUM_SMOOTHNESS = 12.0
LANE = 128     # lane width: feature padding target
SUB = 16       # sublane granularity for bf16 message rows (native (16,128) tile)


def _ceil_to(x, m):
    return ((x + m - 1) // m) * m


def _softplus(x):
    # numerically stable softplus (matches torch.nn.functional.softplus)
    return jnp.log1p(jnp.exp(-jnp.abs(x))) + jnp.maximum(x, 0.0)


def _mish(x):
    return x * jnp.tanh(_softplus(x))


@functools.lru_cache(maxsize=1)
def _vmem_limit_bytes():
    # per-generation VMEM budget (v7x has only 64 MiB per TensorCore)
    try:
        cap = int(pltpu.get_tpu_info().vmem_capacity_bytes)
        return max(32 * 1024 * 1024, min(56 * 1024 * 1024, cap - 8 * 1024 * 1024))
    except Exception:
        return 32 * 1024 * 1024


def _spec(block_shape, index_map, n_buf=None):
    if n_buf is not None:
        return pl.BlockSpec(block_shape, index_map, pipeline_mode=pl.Buffered(n_buf))
    return pl.BlockSpec(block_shape, index_map)


# --------------------------------------------------------------------------
# Kernel 1: fused per-relation gather + relation MLP + residual.
# One pallas_call per arity group; grid = (relations in group,), "parallel".
# --------------------------------------------------------------------------
def relation_kernel(idx_ref, nodes_ref, w1_ref, b1_ref, w2_ref, b2_ref, msg_ref,
                    *, a, a_pad, n_nodes_pad, e_pad):
    # idx_ref:  (1, 1, L) int32, L = a * a_pad, slot-major atom indices
    # nodes_ref:(Np, Ep)  bf16 padded node embeddings (dummy / pad rows zero)
    # w*_ref:   (a, Ep, a*Ep) bf16 lane-fused weight rows
    # b*_ref:   (1, 1, a*Ep) f32 lane-concatenated biases
    # msg_ref:  (L, Ep) bf16 output messages (slot-major rows)
    idx = idx_ref[0]                                          # (1, L) int32
    L = a * a_pad
    nodes = nodes_ref[...]                                    # (Np, Ep) bf16

    # in-kernel gather: bf16 one-hot contracted over nodes on the MXU
    row_iota = lax.broadcasted_iota(jnp.int32, (n_nodes_pad, L), 0)
    onehot = (row_iota == idx).astype(jnp.bfloat16)           # (Np, L)
    gathered = lax.dot_general(onehot, nodes, (((0,), (0,)), ((), ())),
                               preferred_element_type=jnp.float32)   # (L, Ep) f32

    xb = [gathered[i * a_pad:(i + 1) * a_pad, :].astype(jnp.bfloat16)
          for i in range(a)]

    # inner linear: one lane-wide (Ep, a*Ep) matmul per arity slot
    acc1 = b1_ref[0]                                          # (1, a*Ep) f32
    for i in range(a):
        acc1 = acc1 + jnp.dot(xb[i], w1_ref[i],
                              preferred_element_type=jnp.float32)
    h = _mish(acc1)                                           # (a_pad, a*Ep) f32

    # outer linear, same fused layout
    acc2 = b2_ref[0]
    for i in range(a):
        acc2 = acc2 + jnp.dot(h[:, i * e_pad:(i + 1) * e_pad].astype(jnp.bfloat16),
                              w2_ref[i], preferred_element_type=jnp.float32)

    # residual + bf16 store, one lane-dense (a_pad, Ep) block per slot
    for j in range(a):
        msg_ref[j * a_pad:(j + 1) * a_pad, :] = (
            gathered[j * a_pad:(j + 1) * a_pad, :]
            + acc2[:, j * e_pad:(j + 1) * e_pad]).astype(jnp.bfloat16)


def relation_messages_fused(idx_tbl, nodes_bf16, W1, B1, W2, B2, *, a, a_pad,
                            use_buffering):
    R = idx_tbl.shape[0]
    L = a * a_pad
    n_pad, e_pad = nodes_bf16.shape
    wpad = a * e_pad
    wdepth = 3 if (use_buffering and R >= 3) else None
    ndepth = 1 if use_buffering else None
    kern = functools.partial(relation_kernel, a=a, a_pad=a_pad,
                             n_nodes_pad=n_pad, e_pad=e_pad)
    return pl.pallas_call(
        kern,
        out_shape=jax.ShapeDtypeStruct((R * L, e_pad), jnp.bfloat16),
        grid_spec=pltpu.PrefetchScalarGridSpec(
            num_scalar_prefetch=0,
            grid=(R,),
            in_specs=[
                pl.BlockSpec((1, 1, L), lambda r: (r, 0, 0)),
                _spec((n_pad, e_pad), lambda r: (0, 0), ndepth),
                _spec((a, e_pad, wpad), lambda r: (r, 0, 0), wdepth),
                pl.BlockSpec((1, 1, wpad), lambda r: (r, 0, 0)),
                _spec((a, e_pad, wpad), lambda r: (r, 0, 0), wdepth),
                pl.BlockSpec((1, 1, wpad), lambda r: (r, 0, 0)),
            ],
            out_specs=pl.BlockSpec((L, e_pad), lambda r: (r, 0)),
        ),
        compiler_params=pltpu.CompilerParams(
            dimension_semantics=("parallel",),
            vmem_limit_bytes=_vmem_limit_bytes()),
    )(idx_tbl, nodes_bf16, W1, B1, W2, B2)


# --------------------------------------------------------------------------
# Kernel 2: smooth-max aggregation + update MLP.
# grid = (node tiles of tn=128,), "parallel".  Message indices arrive twice:
# scalar-prefetched (SMEM, drives the segmented-max scan) and as a (1, M)
# VMEM vector (drives the one-hot MXU scatter / gather).
# --------------------------------------------------------------------------
def aggregate_update_kernel(idx_sm_ref, idx_ref, msg_ref, x_ref, w1a_ref, w1b_ref,
                            b1_ref, w2_ref, b2_ref, out_ref, *, tn, m_total):
    t = pl.program_id(0)
    e_pad = out_ref.shape[1]
    node_col = t * tn + lax.broadcasted_iota(jnp.int32, (tn, 1), 0)   # (tn, 1)

    # ---- segmented max: chunked scan, no (tn, M, Ep) intermediate ----
    def chunk_body(c, running):
        base = pl.multiple_of(c * SUB, SUB)
        rows = msg_ref[pl.ds(base, SUB), :].astype(jnp.float32)       # (16, Ep)
        for k in range(SUB):
            target = idx_sm_ref[c * SUB + k]                          # SMEM scalar
            upd = jnp.maximum(running, rows[k:k + 1, :])
            running = jnp.where(node_col == target, upd, running)
        return running

    seg_init = jnp.full((tn, e_pad), -1e30, jnp.float32)
    seg_raw = lax.fori_loop(0, m_total // SUB, chunk_body, seg_init)
    # include_self=False: rows that received no message keep their zero init
    exps_max = jnp.where(seg_raw > -1e29, seg_raw, 0.0)               # (tn, Ep)

    # ---- membership one-hot, built once, directly in bf16 ----
    onehot = (node_col == idx_ref[...]).astype(jnp.bfloat16)          # (tn, M)

    # gather per-message offsets and scatter-add exps, both on the MXU
    max_off = lax.dot_general(onehot, exps_max.astype(jnp.bfloat16),
                              (((0,), (0,)), ((), ())),
                              preferred_element_type=jnp.float32)     # (M, Ep)
    msg = msg_ref[...].astype(jnp.float32)                            # (M, Ep)
    # clamp keeps exp <= 1 despite bf16 max_off / non-member offsets of zero
    exps = jnp.exp(MAXIMUM_SMOOTHNESS * jnp.minimum(msg - max_off, 0.0))
    exps_sum = jnp.dot(onehot, exps.astype(jnp.bfloat16),
                       preferred_element_type=jnp.float32) + 1e-16    # (tn, Ep)
    max_msg = jnp.log(exps_sum) * (1.0 / MAXIMUM_SMOOTHNESS) + exps_max

    # update MLP: concat(max_msg, x) @ W1 == max_msg @ W1a + x @ W1b
    h = (jnp.dot(max_msg.astype(jnp.bfloat16), w1a_ref[...],
                 preferred_element_type=jnp.float32)
         + jnp.dot(x_ref[...], w1b_ref[...],
                   preferred_element_type=jnp.float32)
         + b1_ref[...])
    z = _mish(h).astype(jnp.bfloat16)
    out_ref[...] = (jnp.dot(z, w2_ref[...],
                            preferred_element_type=jnp.float32) + b2_ref[...])


def smoothmax_update_fused(idx_flat, idx2d, messages, nodes_bf16,
                           w1a, w1b, b1, w2, b2, *, tn, use_buffering):
    n_pad, e_pad = nodes_bf16.shape
    m_total = messages.shape[0]
    h_pad = w1a.shape[1]
    cdepth = 1 if use_buffering else None
    kern = functools.partial(aggregate_update_kernel, tn=tn, m_total=m_total)
    return pl.pallas_call(
        kern,
        out_shape=jax.ShapeDtypeStruct((n_pad, e_pad), jnp.float32),
        grid_spec=pltpu.PrefetchScalarGridSpec(
            num_scalar_prefetch=1,                 # idx_flat -> SMEM
            grid=(n_pad // tn,),
            in_specs=[
                _spec((1, m_total), lambda t, ip: (0, 0), cdepth),
                _spec((m_total, e_pad), lambda t, ip: (0, 0), cdepth),
                pl.BlockSpec((tn, e_pad), lambda t, ip: (t, 0)),
                _spec((e_pad, h_pad), lambda t, ip: (0, 0), cdepth),
                _spec((e_pad, h_pad), lambda t, ip: (0, 0), cdepth),
                _spec((1, h_pad), lambda t, ip: (0, 0), cdepth),
                _spec((h_pad, e_pad), lambda t, ip: (0, 0), cdepth),
                _spec((1, e_pad), lambda t, ip: (0, 0), cdepth),
            ],
            out_specs=pl.BlockSpec((tn, e_pad), lambda t, ip: (t, 0)),
        ),
        compiler_params=pltpu.CompilerParams(
            dimension_semantics=("parallel",),
            vmem_limit_bytes=_vmem_limit_bytes()),
    )(idx_flat, idx2d, messages, nodes_bf16, w1a, w1b, b1, w2, b2)


# --------------------------------------------------------------------------
# Module forward: numpy parameter stacking (host-side, once) + two kernels.
# --------------------------------------------------------------------------
def smooth_max_message_passing(node_embeddings, atoms, params, embedding_size,
                               *, tn=128):
    assert tn % SUB == 0
    E = embedding_size
    N = node_embeddings.shape[0]
    e_pad = _ceil_to(E, LANE)
    h_pad = _ceil_to(2 * E, LANE)
    n_pad = _ceil_to(N + 1, tn)          # +1 dummy zero node absorbs index padding
    dummy = N

    nodes = jnp.pad(node_embeddings.astype(jnp.float32),
                    ((0, n_pad - N), (0, e_pad - E)))
    nodes_bf16 = nodes.astype(jnp.bfloat16)

    # group grounded relations by arity (no zero-block streaming for low arity)
    groups = {}
    for nm in sorted(params["relations"]):
        if nm in atoms:
            groups.setdefault(int(params["relations"][nm]["arity"]), []).append(nm)

    msg_chunks, idx_chunks = [], []
    for a in sorted(groups):
        names = groups[a]
        R = len(names)
        n_atoms = [np.asarray(atoms[nm]).size // a for nm in names]
        a_pad = _ceil_to(max(n_atoms), SUB)
        L = a * a_pad
        wpad = a * e_pad

        idx_np = np.full((R, 1, L), dummy, np.int32)
        W1 = np.zeros((R * a, e_pad, wpad), np.float32)
        W2 = np.zeros((R * a, e_pad, wpad), np.float32)
        B1 = np.zeros((R, 1, wpad), np.float32)
        B2 = np.zeros((R, 1, wpad), np.float32)
        for r, nm in enumerate(names):
            p = params["relations"][nm]
            w1 = np.asarray(p["w1"], np.float32)
            b1 = np.asarray(p["b1"], np.float32)
            w2 = np.asarray(p["w2"], np.float32)
            b2 = np.asarray(p["b2"], np.float32)
            vals = np.asarray(atoms[nm]).astype(np.int32).reshape(-1, a)
            ar = vals.shape[0]
            for j in range(a):
                idx_np[r, 0, j * a_pad:j * a_pad + ar] = vals[:, j]
                B1[r, 0, j * e_pad:j * e_pad + E] = b1[0, j * E:(j + 1) * E]
                B2[r, 0, j * e_pad:j * e_pad + E] = b2[0, j * E:(j + 1) * E]
                for i in range(a):
                    W1[r * a + i, :E, j * e_pad:j * e_pad + E] = \
                        w1[i * E:(i + 1) * E, j * E:(j + 1) * E]
                    W2[r * a + i, :E, j * e_pad:j * e_pad + E] = \
                        w2[i * E:(i + 1) * E, j * E:(j + 1) * E]

        args = (jnp.asarray(idx_np), nodes_bf16,
                jnp.asarray(W1, jnp.bfloat16), jnp.asarray(B1),
                jnp.asarray(W2, jnp.bfloat16), jnp.asarray(B2))
        try:
            msgs = relation_messages_fused(*args, a=a, a_pad=a_pad,
                                           use_buffering=True)
        except Exception:
            msgs = relation_messages_fused(*args, a=a, a_pad=a_pad,
                                           use_buffering=False)
        msg_chunks.append(msgs)
        idx_chunks.append(idx_np.reshape(-1))

    messages = msg_chunks[0] if len(msg_chunks) == 1 else jnp.concatenate(msg_chunks, 0)
    idx_all_np = np.concatenate(idx_chunks)
    idx_flat = jnp.asarray(idx_all_np, jnp.int32)                 # (M,)  -> SMEM
    idx2d = jnp.asarray(idx_all_np.reshape(1, -1), jnp.int32)     # (1,M) -> VMEM

    # update-MLP weights, split for the concat-free formulation
    up = params["update"]
    w1u = np.asarray(up["w1"], np.float32)
    W1a = np.zeros((e_pad, h_pad), np.float32); W1a[:E, :2 * E] = w1u[:E, :]
    W1b = np.zeros((e_pad, h_pad), np.float32); W1b[:E, :2 * E] = w1u[E:, :]
    UB1 = np.zeros((1, h_pad), np.float32); UB1[0, :2 * E] = np.asarray(up["b1"])[0]
    UW2 = np.zeros((h_pad, e_pad), np.float32); UW2[:2 * E, :E] = np.asarray(up["w2"])
    UB2 = np.zeros((1, e_pad), np.float32); UB2[0, :E] = np.asarray(up["b2"])[0]

    args2 = (idx_flat, idx2d, messages, nodes_bf16,
             jnp.asarray(W1a, jnp.bfloat16), jnp.asarray(W1b, jnp.bfloat16),
             jnp.asarray(UB1), jnp.asarray(UW2, jnp.bfloat16), jnp.asarray(UB2))
    try:
        out_pad = smoothmax_update_fused(*args2, tn=tn, use_buffering=True)
    except Exception:
        out_pad = smoothmax_update_fused(*args2, tn=tn, use_buffering=False)
    return out_pad[:N, :E]


# --------------------------------------------------------------------------
# Pure-JAX f32 reference (same math, XLA ops) for correctness checking
# --------------------------------------------------------------------------
def reference_forward(node_embeddings, atoms, params, E):
    N = node_embeddings.shape[0]
    msgs, idxs = [], []
    for name in sorted(params["relations"].keys()):
        if name not in atoms:
            continue
        p = params["relations"][name]
        vals = atoms[name].astype(jnp.int32)
        x = node_embeddings[vals].reshape(-1, p["arity"] * E)
        y = _mish(x @ p["w1"] + p["b1"]) @ p["w2"] + p["b2"]
        msgs.append((x + y).reshape(-1, E))
        idxs.append(vals)
    messages = jnp.concatenate(msgs, 0)
    indices = jnp.concatenate(idxs, 0)
    seg_max = jax.ops.segment_max(messages, indices, num_segments=N)
    count = jax.ops.segment_sum(jnp.ones((messages.shape[0],), jnp.float32),
                                indices, num_segments=N)
    seg_max = jnp.where((count > 0)[:, None], seg_max, 0.0)
    max_off = seg_max[indices]
    exps = jnp.exp(MAXIMUM_SMOOTHNESS * (messages - max_off))
    exps_sum = jax.ops.segment_sum(exps, indices, num_segments=N) + 1e-16
    max_msg = jnp.log(exps_sum) / MAXIMUM_SMOOTHNESS + seg_max
    up = params["update"]
    h = jnp.concatenate([max_msg, node_embeddings], 1)
    return _mish(h @ up["w1"] + up["b1"]) @ up["w2"] + up["b2"]


# --------------------------------------------------------------------------
# Deterministic parameter init (Linear weights stored as (in, out))
# --------------------------------------------------------------------------
def init_params(key, signatures, E):
    params = {"relations": {}}
    for name, arity in sorted(signatures):
        d = arity * E
        if d == 0:
            continue
        key, k1, k2, k3, k4 = jax.random.split(key, 5)
        params["relations"][name] = dict(
            arity=arity,
            w1=0.1 * jax.random.normal(k1, (d, d), jnp.float32),
            b1=0.1 * jax.random.normal(k2, (1, d), jnp.float32),
            w2=0.1 * jax.random.normal(k3, (d, d), jnp.float32),
            b2=0.1 * jax.random.normal(k4, (1, d), jnp.float32),
        )
    key, k1, k2, k3, k4 = jax.random.split(key, 5)
    params["update"] = dict(
        w1=0.1 * jax.random.normal(k1, (2 * E, 2 * E), jnp.float32),
        b1=0.1 * jax.random.normal(k2, (1, 2 * E), jnp.float32),
        w2=0.1 * jax.random.normal(k3, (2 * E, E), jnp.float32),
        b2=0.1 * jax.random.normal(k4, (1, E), jnp.float32),
    )
    return params


if __name__ == "__main__":
    E, N = 32, 16
    # predicate signatures: (name, arity); "near" has no ground atoms -> skipped
    signatures = [("on", 2), ("clear", 1), ("near", 2)]

    key = jax.random.PRNGKey(0)
    key, kx, kon, kcl = jax.random.split(key, 4)
    node_embeddings = jax.random.normal(kx, (N, E), jnp.float32)
    atoms = {
        "on": jax.random.randint(kon, (6 * 2,), 0, N, jnp.int32),   # 6 binary atoms
        "clear": jax.random.randint(kcl, (8,), 0, N, jnp.int32),    # 8 unary atoms
    }
    params = init_params(key, signatures, E)

    out = smooth_max_message_passing(node_embeddings, atoms, params, E, tn=128)
    out = jax.block_until_ready(out)

    ref = reference_forward(node_embeddings, atoms, params, E)
    # bf16 MXU operands / bf16 message storage with f32 accumulation -> loose tol
    np.testing.assert_allclose(np.asarray(out), np.asarray(ref),
                               rtol=5e-2, atol=5e-2)
    print("KERNEL_OK")
</pallas_src>

<mosaic_0001>
module attributes {stable_mosaic.version = 11 : i64} {
  func.func @relation_kernel(%arg0: i32, %arg1: memref<1x1x16xi32, #tpu.memory_space<vmem>>, %arg2: memref<128x128xbf16, #tpu.memory_space<vmem>>, %arg3: memref<1x128x128xbf16, #tpu.memory_space<vmem>>, %arg4: memref<1x1x128xf32, #tpu.memory_space<vmem>>, %arg5: memref<1x128x128xbf16, #tpu.memory_space<vmem>>, %arg6: memref<1x1x128xf32, #tpu.memory_space<vmem>>, %arg7: memref<16x128xbf16, #tpu.memory_space<vmem>>) attributes {dimension_semantics = [#tpu.dimension_semantics<parallel>], iteration_bounds = array<i64: 1>, scalar_prefetch = 0 : i64, scratch_operands = 0 : i64, tpu.core_type = #tpu.core_type<tc>, window_params = [{transform_indices = @transform_0, window_bounds = array<i64: 1, 1, 16>}, {pipeline_mode = #tpu.pipeline_mode<synchronous>, transform_indices = @transform_1, window_bounds = array<i64: 128, 128>}, {transform_indices = @transform_2, window_bounds = array<i64: 1, 128, 128>}, {transform_indices = @transform_3, window_bounds = array<i64: 1, 1, 128>}, {transform_indices = @transform_4, window_bounds = array<i64: 1, 128, 128>}, {transform_indices = @transform_5, window_bounds = array<i64: 1, 1, 128>}, {transform_indices = @transform_6, window_bounds = array<i64: 16, 128>}]} {
    %c0 = arith.constant 0 : index
    %c0_0 = arith.constant 0 : index
    %c0_1 = arith.constant 0 : index
    %0 = vector.load %arg1[%c0, %c0_0, %c0_1] : memref<1x1x16xi32, #tpu.memory_space<vmem>>, vector<1x1x16xi32>
    %1 = vector.shape_cast %0 : vector<1x1x16xi32> to vector<1x16xi32>
    %c0_2 = arith.constant 0 : index
    %c0_3 = arith.constant 0 : index
    %2 = vector.load %arg2[%c0_2, %c0_3] : memref<128x128xbf16, #tpu.memory_space<vmem>>, vector<128x128xbf16>
    %3 = tpu.iota {dimensions = array<i32: 0>} : vector<128x16xi32>
    %4 = vector.broadcast %1 : vector<1x16xi32> to vector<128x16xi32>
    %5 = arith.cmpi eq, %3, %4 : vector<128x16xi32>
    %6 = arith.extui %5 : vector<128x16xi1> to vector<128x16xi32>
    %7 = arith.sitofp %6 : vector<128x16xi32> to vector<128x16xf32>
    %8 = arith.truncf %7 : vector<128x16xf32> to vector<128x16xbf16>
    %cst = arith.constant dense<0.000000e+00> : vector<16x128xf32>
    %9 = tpu.matmul %8, %2, %cst {dimension_numbers = #tpu.dot_dimension_numbers<[0], [0], [1], [1], [0, 1, 1, 1], [], []>} : vector<128x16xbf16>, vector<128x128xbf16>, vector<16x128xf32> -> vector<16x128xf32>
    %10 = arith.truncf %9 : vector<16x128xf32> to vector<16x128xbf16>
    %c0_4 = arith.constant 0 : index
    %c0_5 = arith.constant 0 : index
    %c0_6 = arith.constant 0 : index
    %11 = vector.load %arg4[%c0_4, %c0_5, %c0_6] : memref<1x1x128xf32, #tpu.memory_space<vmem>>, vector<1x1x128xf32>
    %12 = vector.shape_cast %11 : vector<1x1x128xf32> to vector<1x128xf32>
    %c0_7 = arith.constant 0 : index
    %c0_8 = arith.constant 0 : index
    %c0_9 = arith.constant 0 : index
    %13 = vector.load %arg3[%c0_7, %c0_8, %c0_9] : memref<1x128x128xbf16, #tpu.memory_space<vmem>>, vector<1x128x128xbf16>
    %14 = vector.shape_cast %13 : vector<1x128x128xbf16> to vector<128x128xbf16>
    %cst_10 = arith.constant dense<0.000000e+00> : vector<16x128xf32>
    %15 = tpu.matmul %10, %14, %cst_10 {dimension_numbers = #tpu.dot_dimension_numbers<[1], [0], [0], [1], [0, 0, 1, 1], [], []>} : vector<16x128xbf16>, vector<128x128xbf16>, vector<16x128xf32> -> vector<16x128xf32>
    %16 = vector.broadcast %12 : vector<1x128xf32> to vector<16x128xf32>
    %17 = arith.addf %16, %15 : vector<16x128xf32>
    %18 = math.absf %17 : vector<16x128xf32>
    %cst_11 = arith.constant 0.000000e+00 : f32
    %19 = vector.broadcast %cst_11 : f32 to vector<16x128xf32>
    %20 = arith.subf %19, %18 : vector<16x128xf32>
    %21 = math.exp %20 : vector<16x128xf32>
    %22 = math.log1p %21 : vector<16x128xf32>
    %cst_12 = arith.constant 0.000000e+00 : f32
    %23 = vector.broadcast %cst_12 : f32 to vector<16x128xf32>
    %24 = arith.maximumf %17, %23 : vector<16x128xf32>
    %25 = arith.addf %22, %24 : vector<16x128xf32>
    %26 = math.tanh %25 : vector<16x128xf32>
    %27 = arith.mulf %17, %26 : vector<16x128xf32>
    %c0_13 = arith.constant 0 : index
    %c0_14 = arith.constant 0 : index
    %c0_15 = arith.constant 0 : index
    %28 = vector.load %arg6[%c0_13, %c0_14, %c0_15] : memref<1x1x128xf32, #tpu.memory_space<vmem>>, vector<1x1x128xf32>
    %29 = vector.shape_cast %28 : vector<1x1x128xf32> to vector<1x128xf32>
    %30 = arith.truncf %27 : vector<16x128xf32> to vector<16x128xbf16>
    %c0_16 = arith.constant 0 : index
    %c0_17 = arith.constant 0 : index
    %c0_18 = arith.constant 0 : index
    %31 = vector.load %arg5[%c0_16, %c0_17, %c0_18] : memref<1x128x128xbf16, #tpu.memory_space<vmem>>, vector<1x128x128xbf16>
    %32 = vector.shape_cast %31 : vector<1x128x128xbf16> to vector<128x128xbf16>
    %cst_19 = arith.constant dense<0.000000e+00> : vector<16x128xf32>
    %33 = tpu.matmul %30, %32, %cst_19 {dimension_numbers = #tpu.dot_dimension_numbers<[1], [0], [0], [1], [0, 0, 1, 1], [], []>} : vector<16x128xbf16>, vector<128x128xbf16>, vector<16x128xf32> -> vector<16x128xf32>
    %34 = vector.broadcast %29 : vector<1x128xf32> to vector<16x128xf32>
    %35 = arith.addf %34, %33 : vector<16x128xf32>
    %36 = arith.addf %9, %35 : vector<16x128xf32>
    %37 = arith.truncf %36 : vector<16x128xf32> to vector<16x128xbf16>
    %c0_20 = arith.constant 0 : index
    %c0_21 = arith.constant 0 : index
    %38 = vector.load %arg7[%c0_20, %c0_21] : memref<16x128xbf16, #tpu.memory_space<vmem>>, vector<16x128xbf16>
    tpu.vector_store %arg7[%c0_20, %c0_21], %37 {strides = array<i32>} : memref<16x128xbf16, #tpu.memory_space<vmem>>, vector<16x128xbf16>,
    return
  }
  func.func @transform_0(%arg0: i32) -> (i32, i32, i32) {
    %c0_i32 = arith.constant 0 : i32
    %c0_i32_0 = arith.constant 0 : i32
    %c0_i32_1 = arith.constant 0 : i32
    return %arg0, %c0_i32, %c0_i32_0 : i32, i32, i32
  }
  func.func @transform_1(%arg0: i32) -> (i32, i32) {
    %c0_i32 = arith.constant 0 : i32
    %c0_i32_0 = arith.constant 0 : i32
    %c0_i32_1 = arith.constant 0 : i32
    return %c0_i32, %c0_i32_0 : i32, i32
  }
  func.func @transform_2(%arg0: i32) -> (i32, i32, i32) {
    %c0_i32 = arith.constant 0 : i32
    %c0_i32_0 = arith.constant 0 : i32
    %c0_i32_1 = arith.constant 0 : i32
    return %arg0, %c0_i32, %c0_i32_0 : i32, i32, i32
  }
  func.func @transform_3(%arg0: i32) -> (i32, i32, i32) {
    %c0_i32 = arith.constant 0 : i32
    %c0_i32_0 = arith.constant 0 : i32
    %c0_i32_1 = arith.constant 0 : i32
    return %arg0, %c0_i32, %c0_i32_0 : i32, i32, i32
  }
  func.func @transform_4(%arg0: i32) -> (i32, i32, i32) {
    %c0_i32 = arith.constant 0 : i32
    %c0_i32_0 = arith.constant 0 : i32
    %c0_i32_1 = arith.constant 0 : i32
    return %arg0, %c0_i32, %c0_i32_0 : i32, i32, i32
  }
  func.func @transform_5(%arg0: i32) -> (i32, i32, i32) {
    %c0_i32 = arith.constant 0 : i32
    %c0_i32_0 = arith.constant 0 : i32
    %c0_i32_1 = arith.constant 0 : i32
    return %arg0, %c0_i32, %c0_i32_0 : i32, i32, i32
  }
  func.func @transform_6(%arg0: i32) -> (i32, i32) {
    %c0_i32 = arith.constant 0 : i32
    %c0_i32_0 = arith.constant 0 : i32
    return %arg0, %c0_i32 : i32, i32
  }
}

module attributes {stable_mosaic.version = 11 : i64} {
  func.func @relation_kernel(%arg0: i32, %arg1: memref<1x1x16xi32, #tpu.memory_space<vmem>>, %arg2: memref<128x128xbf16, #tpu.memory_space<vmem>>, %arg3: memref<1x128x128xbf16, #tpu.memory_space<vmem>>, %arg4: memref<1x1x128xf32, #tpu.memory_space<vmem>>, %arg5: memref<1x128x128xbf16, #tpu.memory_space<vmem>>, %arg6: memref<1x1x128xf32, #tpu.memory_space<vmem>>, %arg7: memref<16x128xbf16, #tpu.memory_space<vmem>>) attributes {dimension_semantics = [#tpu.dimension_semantics<parallel>], iteration_bounds = array<i64: 1>, scalar_prefetch = 0 : i64, scratch_operands = 0 : i64, tpu.core_type = #tpu.core_type<tc>, window_params = [{transform_indices = @transform_0, window_bounds = array<i64: 1, 1, 16>}, {pipeline_mode = #tpu.pipeline_mode<synchronous>, transform_indices = @transform_1, window_bounds = array<i64: 128, 128>}, {transform_indices = @transform_2, window_bounds = array<i64: 1, 128, 128>}, {transform_indices = @transform_3, window_bounds = array<i64: 1, 1, 128>}, {transform_indices = @transform_4, window_bounds = array<i64: 1, 128, 128>}, {transform_indices = @transform_5, window_bounds = array<i64: 1, 1, 128>}, {transform_indices = @transform_6, window_bounds = array<i64: 16, 128>}]} {
    %c0 = arith.constant 0 : index
    %c0_0 = arith.constant 0 : index
    %c0_1 = arith.constant 0 : index
    %0 = vector.load %arg1[%c0, %c0_0, %c0_1] : memref<1x1x16xi32, #tpu.memory_space<vmem>>, vector<1x1x16xi32>
    %1 = vector.shape_cast %0 : vector<1x1x16xi32> to vector<1x16xi32>
    %c0_2 = arith.constant 0 : index
    %c0_3 = arith.constant 0 : index
    %2 = vector.load %arg2[%c0_2, %c0_3] : memref<128x128xbf16, #tpu.memory_space<vmem>>, vector<128x128xbf16>
    %3 = tpu.iota {dimensions = array<i32: 0>} : vector<128x16xi32>
    %4 = vector.broadcast %1 : vector<1x16xi32> to vector<128x16xi32>
    %5 = arith.cmpi eq, %3, %4 : vector<128x16xi32>
    %6 = arith.extui %5 : vector<128x16xi1> to vector<128x16xi32>
    %7 = arith.sitofp %6 : vector<128x16xi32> to vector<128x16xf32>
    %8 = arith.truncf %7 : vector<128x16xf32> to vector<128x16xbf16>
    %cst = arith.constant dense<0.000000e+00> : vector<16x128xf32>
    %9 = tpu.matmul %8, %2, %cst {dimension_numbers = #tpu.dot_dimension_numbers<[0], [0], [1], [1], [0, 1, 1, 1], [], []>} : vector<128x16xbf16>, vector<128x128xbf16>, vector<16x128xf32> -> vector<16x128xf32>
    %10 = arith.truncf %9 : vector<16x128xf32> to vector<16x128xbf16>
    %c0_4 = arith.constant 0 : index
    %c0_5 = arith.constant 0 : index
    %c0_6 = arith.constant 0 : index
    %11 = vector.load %arg4[%c0_4, %c0_5, %c0_6] : memref<1x1x128xf32, #tpu.memory_space<vmem>>, vector<1x1x128xf32>
    %12 = vector.shape_cast %11 : vector<1x1x128xf32> to vector<1x128xf32>
    %c0_7 = arith.constant 0 : index
    %c0_8 = arith.constant 0 : index
    %c0_9 = arith.constant 0 : index
    %13 = vector.load %arg3[%c0_7, %c0_8, %c0_9] : memref<1x128x128xbf16, #tpu.memory_space<vmem>>, vector<1x128x128xbf16>
    %14 = vector.shape_cast %13 : vector<1x128x128xbf16> to vector<128x128xbf16>
    %cst_10 = arith.constant dense<0.000000e+00> : vector<16x128xf32>
    %15 = tpu.matmul %10, %14, %cst_10 {dimension_numbers = #tpu.dot_dimension_numbers<[1], [0], [0], [1], [0, 0, 1, 1], [], []>} : vector<16x128xbf16>, vector<128x128xbf16>, vector<16x128xf32> -> vector<16x128xf32>
    %16 = vector.broadcast %12 : vector<1x128xf32> to vector<16x128xf32>
    %17 = arith.addf %16, %15 : vector<16x128xf32>
    %18 = math.absf %17 : vector<16x128xf32>
    %cst_11 = arith.constant 0.000000e+00 : f32
    %19 = vector.broadcast %cst_11 : f32 to vector<16x128xf32>
    %20 = arith.subf %19, %18 : vector<16x128xf32>
    %21 = math.exp %20 : vector<16x128xf32>
    %22 = math.log1p %21 : vector<16x128xf32>
    %cst_12 = arith.constant 0.000000e+00 : f32
    %23 = vector.broadcast %cst_12 : f32 to vector<16x128xf32>
    %24 = arith.maximumf %17, %23 : vector<16x128xf32>
    %25 = arith.addf %22, %24 : vector<16x128xf32>
    %26 = math.tanh %25 : vector<16x128xf32>
    %27 = arith.mulf %17, %26 : vector<16x128xf32>
    %c0_13 = arith.constant 0 : index
    %c0_14 = arith.constant 0 : index
    %c0_15 = arith.constant 0 : index
    %28 = vector.load %arg6[%c0_13, %c0_14, %c0_15] : memref<1x1x128xf32, #tpu.memory_space<vmem>>, vector<1x1x128xf32>
    %29 = vector.shape_cast %28 : vector<1x1x128xf32> to vector<1x128xf32>
    %30 = arith.truncf %27 : vector<16x128xf32> to vector<16x128xbf16>
    %c0_16 = arith.constant 0 : index
    %c0_17 = arith.constant 0 : index
    %c0_18 = arith.constant 0 : index
    %31 = vector.load %arg5[%c0_16, %c0_17, %c0_18] : memref<1x128x128xbf16, #tpu.memory_space<vmem>>, vector<1x128x128xbf16>
    %32 = vector.shape_cast %31 : vector<1x128x128xbf16> to vector<128x128xbf16>
    %cst_19 = arith.constant dense<0.000000e+00> : vector<16x128xf32>
    %33 = tpu.matmul %30, %32, %cst_19 {dimension_numbers = #tpu.dot_dimension_numbers<[1], [0], [0], [1], [0, 0, 1, 1], [], []>} : vector<16x128xbf16>, vector<128x128xbf16>, vector<16x128xf32> -> vector<16x128xf32>
    %34 = vector.broadcast %29 : vector<1x128xf32> to vector<16x128xf32>
    %35 = arith.addf %34, %33 : vector<16x128xf32>
    %36 = arith.addf %9, %35 : vector<16x128xf32>
    %37 = arith.truncf %36 : vector<16x128xf32> to vector<16x128xbf16>
    %c0_20 = arith.constant 0 : index
    %c0_21 = arith.constant 0 : index
    %38 = vector.load %arg7[%c0_20, %c0_21] : memref<16x128xbf16, #tpu.memory_space<vmem>>, vector<16x128xbf16>
    tpu.vector_store %arg7[%c0_20, %c0_21], %37 {strides = array<i32>} : memref<16x128xbf16, #tpu.memory_space<vmem>>, vector<16x128xbf16>,
    return
  }
  func.func @transform_0(%arg0: i32) -> (i32, i32, i32) {
    %c0_i32 = arith.constant 0 : i32
    %c0_i32_0 = arith.constant 0 : i32
    %c0_i32_1 = arith.constant 0 : i32
    return %arg0, %c0_i32, %c0_i32_0 : i32, i32, i32
  }
  func.func @transform_1(%arg0: i32) -> (i32, i32) {
    %c0_i32 = arith.constant 0 : i32
    %c0_i32_0 = arith.constant 0 : i32
    %c0_i32_1 = arith.constant 0 : i32
    return %c0_i32, %c0_i32_0 : i32, i32
  }
  func.func @transform_2(%arg0: i32) -> (i32, i32, i32) {
    %c0_i32 = arith.constant 0 : i32
    %c0_i32_0 = arith.constant 0 : i32
    %c0_i32_1 = arith.constant 0 : i32
    return %arg0, %c0_i32, %c0_i32_0 : i32, i32, i32
  }
  func.func @transform_3(%arg0: i32) -> (i32, i32, i32) {
    %c0_i32 = arith.constant 0 : i32
    %c0_i32_0 = arith.constant 0 : i32
    %c0_i32_1 = arith.constant 0 : i32
    return %arg0, %c0_i32, %c0_i32_0 : i32, i32, i32
  }
  func.func @transform_4(%arg0: i32) -> (i32, i32, i32) {
    %c0_i32 = arith.constant 0 : i32
    %c0_i32_0 = arith.constant 0 : i32
    %c0_i32_1 = arith.constant 0 : i32
    return %arg0, %c0_i32, %c0_i32_0 : i32, i32, i32
  }
  func.func @transform_5(%arg0: i32) -> (i32, i32, i32) {
    %c0_i32 = arith.constant 0 : i32
    %c0_i32_0 = arith.constant 0 : i32
    %c0_i32_1 = arith.constant 0 : i32
    return %arg0, %c0_i32, %c0_i32_0 : i32, i32, i32
  }
  func.func @transform_6(%arg0: i32) -> (i32, i32) {
    %c0_i32 = arith.constant 0 : i32
    %c0_i32_0 = arith.constant 0 : i32
    return %arg0, %c0_i32 : i32, i32
  }
}

</mosaic_0001>

<llo_original>
// kernel: tpu_custom_call.1
$region0: #{tpu_custom_call.1}
  #allocation0 [shape = 'u32[]', space=smem, size = 0x4, offset = 0x4, fixed_abs, tag = 'smem constant byte address 0x4 - core index']
  #allocation1 [shape = 'u32[144,128]{1,0:T(1,128)}', space=vmem, size = 0x12000, scoped, tag = 'internal scratch']
  %s0 = inlined_call_operand.hbm [shape: s32[1,1,16], index: 0, kind: input, shape index: {}]
  %s1 = inlined_call_operand.hbm [shape: bf16[128,128], index: 1, kind: input, shape index: {}]
  %s2 = inlined_call_operand.hbm [shape: bf16[1,128,128], index: 2, kind: input, shape index: {}]
  %s3 = inlined_call_operand.vmem [shape: f32[1,1,128], index: 3, kind: input, shape index: {}]
  %s4 = inlined_call_operand.hbm [shape: bf16[1,128,128], index: 4, kind: input, shape index: {}]
  %s5 = inlined_call_operand.vmem [shape: f32[1,1,128], index: 5, kind: input, shape index: {}]
  %s6 = inlined_call_operand.hbm [shape: bf16[16,128], index: 6, kind: output, shape index: {}]
  %s7 = sld [smem:[#allocation0]]
  $region50: #{tpu_custom_call.1} parent=0
    _
  %s9 = ssub.s32 1, %s7
  %s10 = scalar_select 0, %s9, %s7
  $region1: #{tpu_custom_call.1} parent=0
    #allocation2 [shape = 'u8[512]{0}', space=vmem, size = 0x400, scoped, tag = 'input window, operand 0, single buffered']
    #allocation3 [shape = 's32[1]{0}', space=sflag, size = 0x4, scoped, tag = 'scoped memory for tpu_custom_call.1']
    #allocation4 [shape = 's32[1]{0}', space=sflag, size = 0x4, scoped, tag = 'scoped memory for tpu_custom_call.1']
    #allocation5 [shape = 'u8[32768]{0}', space=vmem, size = 0x8000, scoped, tag = 'input window, operand 1, single buffered']
    #allocation6 [shape = 's32[1]{0}', space=sflag, size = 0x4, scoped, tag = 'scoped memory for tpu_custom_call.1']
    #allocation7 [shape = 'u8[32768]{0}', space=vmem, size = 0x8000, scoped, tag = 'input window, operand 2, single buffered']
    #allocation8 [shape = 'u8[32768]{0}', space=vmem, size = 0x8000, scoped, tag = 'input window, operand 4, single buffered']
    #allocation9 [shape = 's32[1]{0}', space=sflag, size = 0x4, scoped, tag = 'scoped memory for tpu_custom_call.1']
    #allocation10 [shape = 'u8[4096]{0}', space=vmem, size = 0x1000, scoped, tag = 'output window, operand 0, single buffered']
    %11 = vsyncpa [#allocation3], 0
    %12 = vsyncpa [#allocation6], 0
    %13 = vsyncpa [#allocation9], 0
    %14 = vsyncpa [#allocation4], 0
    // Predicated region
    $region2: #{tpu_custom_call.1} parent=1 // pred_check
      _
    $region3: #{tpu_custom_call.1} parent=1 // pred_check_branch
      %16 = sbr.rel (0) target = $region5
    $region4: #{tpu_custom_call.1} parent=1 // pred_region
      %s18 = ssub.s32 16, 16
      %19 = vsyncadd [#allocation3], %s18
      %s21 = sshll.u32 [#allocation2], 4
      %s22 = int_to_ptr.vmem [resolvable:$true] %s21
      %24 = dma.hbm_to_vmem [thread:$0]  %s0, 16, %s22, [#allocation3]
    $region5: #{tpu_custom_call.1} parent=1 // pred_fallthru
      _
    // Predicated region
    $region6: #{tpu_custom_call.1} parent=1 // pred_check
      _
    $region7: #{tpu_custom_call.1} parent=1 // pred_check_branch
      %26 = sbr.rel (0) target = $region9
    $region8: #{tpu_custom_call.1} parent=1 // pred_region
      %s28 = ssub.s32 1024, 1024
      %29 = vsyncadd [#allocation6], %s28
      %s30 = sshll.u32 [#allocation5], 4
      %s31 = int_to_ptr.vmem [resolvable:$true] %s30
      %36 = dma.hbm_to_vmem [thread:$0]  %s1, 1024, %s31, [#allocation6], 64, 64, 4
    $region9: #{tpu_custom_call.1} parent=1 // pred_fallthru
      _
    // Predicated region
    $region10: #{tpu_custom_call.1} parent=1 // pred_check
      _
    $region11: #{tpu_custom_call.1} parent=1 // pred_check_branch
      %38 = sbr.rel (0) target = $region13
    $region12: #{tpu_custom_call.1} parent=1 // pred_region
      %s40 = ssub.s32 1024, 1024
      %41 = vsyncadd [#allocation6], %s40
      %s42 = sshll.u32 [#allocation7], 4
      %s43 = int_to_ptr.vmem [resolvable:$true] %s42
      %48 = dma.hbm_to_vmem [thread:$0]  %s2, 1024, %s43, [#allocation6], 64, 64, 4
    $region13: #{tpu_custom_call.1} parent=1 // pred_fallthru
      _
    // Predicated region
    $region14: #{tpu_custom_call.1} parent=1 // pred_check
      _
    $region15: #{tpu_custom_call.1} parent=1 // pred_check_branch
      %50 = sbr.rel (0) target = $region17
    $region16: #{tpu_custom_call.1} parent=1 // pred_region
      _
    $region17: #{tpu_custom_call.1} parent=1 // pred_fallthru
      _
    // Predicated region
    $region18: #{tpu_custom_call.1} parent=1 // pred_check
      _
    $region19: #{tpu_custom_call.1} parent=1 // pred_check_branch
      %52 = sbr.rel (0) target = $region21
    $region20: #{tpu_custom_call.1} parent=1 // pred_region
      %s54 = ssub.s32 1024, 1024
      %55 = vsyncadd [#allocation9], %s54
      %s56 = sshll.u32 [#allocation8], 4
      %s57 = int_to_ptr.vmem [resolvable:$true] %s56
      %62 = dma.hbm_to_vmem [thread:$0]  %s4, 1024, %s57, [#allocation9], 64, 64, 4
    $region21: #{tpu_custom_call.1} parent=1 // pred_fallthru
      _
    // Predicated region
    $region22: #{tpu_custom_call.1} parent=1 // pred_check
      _
    $region23: #{tpu_custom_call.1} parent=1 // pred_check_branch
      %64 = sbr.rel (0) target = $region25
    $region24: #{tpu_custom_call.1} parent=1 // pred_region
      _
    $region25: #{tpu_custom_call.1} parent=1 // pred_fallthru
      _
    // Predicated region
    $region26: #{tpu_custom_call.1} parent=1 // pred_check
      _
    $region27: #{tpu_custom_call.1} parent=1 // pred_check_branch
      %66 = sbr.rel (0) target = $region29
    $region28: #{tpu_custom_call.1} parent=1 // pred_region
      %67 = dma.done [#allocation3], 16
    $region29: #{tpu_custom_call.1} parent=1 // pred_fallthru
      _
    // Predicated region
    $region30: #{tpu_custom_call.1} parent=1 // pred_check
      _
    $region31: #{tpu_custom_call.1} parent=1 // pred_check_branch
      %69 = sbr.rel (0) target = $region33
    $region32: #{tpu_custom_call.1} parent=1 // pred_region
      %70 = dma.done [#allocation6], 1024
    $region33: #{tpu_custom_call.1} parent=1 // pred_fallthru
      _
    // Predicated region
    $region34: #{tpu_custom_call.1} parent=1 // pred_check
      _
    $region35: #{tpu_custom_call.1} parent=1 // pred_check_branch
      %72 = sbr.rel (0) target = $region37
    $region36: #{tpu_custom_call.1} parent=1 // pred_region
      %73 = dma.done [#allocation6], 1024
    $region37: #{tpu_custom_call.1} parent=1 // pred_fallthru
      _
    // Predicated region
    $region38: #{tpu_custom_call.1} parent=1 // pred_check
      _
    $region39: #{tpu_custom_call.1} parent=1 // pred_check_branch
      %75 = sbr.rel (0) target = $region41
    $region40: #{tpu_custom_call.1} parent=1 // pred_region
      %76 = dma.done [#allocation9], 1024
    $region41: #{tpu_custom_call.1} parent=1 // pred_fallthru
      _
    %v78 = vld [vmem:[#allocation2] sm:$0x1]
    %v79 = vld [vmem:[#allocation5] sm:$0xf]
    %v80 = vld [vmem:[#allocation5 + $0x4] sm:$0xf]
    %v81 = vld [vmem:[#allocation5 + $0x8] sm:$0xf]
    %v82 = vld [vmem:[#allocation5 + $0xc] sm:$0xf]
    %v83 = vld [vmem:[#allocation5 + $0x10] sm:$0xf]
    %v84 = vld [vmem:[#allocation5 + $0x14] sm:$0xf]
    %v85 = vld [vmem:[#allocation5 + $0x18] sm:$0xf]
    %v86 = vld [vmem:[#allocation5 + $0x1c] sm:$0xf]
    %v87 = vld [vmem:[#allocation5 + $0x20] sm:$0xf]
    %v88 = vld [vmem:[#allocation5 + $0x24] sm:$0xf]
    %v89 = vld [vmem:[#allocation5 + $0x28] sm:$0xf]
    %v90 = vld [vmem:[#allocation5 + $0x2c] sm:$0xf]
    %v91 = vld [vmem:[#allocation5 + $0x30] sm:$0xf]
    %v92 = vld [vmem:[#allocation5 + $0x34] sm:$0xf]
    %v93 = vld [vmem:[#allocation5 + $0x38] sm:$0xf]
    %v94 = vld [vmem:[#allocation5 + $0x3c] sm:$0xf]
    %v95 = vlaneseq
    %v96 = vshrl.u32 %v95, 7
    %v97 = vadd.s32 %v96, 8
    %v98 = vadd.s32 %v96, 16
    %v99 = vadd.s32 %v96, 24
    %v100 = vadd.s32 %v96, 32
    %v101 = vadd.s32 %v96, 40
    %v102 = vadd.s32 %v96, 48
    %v103 = vadd.s32 %v96, 56
    %v104 = vadd.s32 %v96, 64
    %v105 = vadd.s32 %v96, 72
    %v106 = vadd.s32 %v96, 80
    %v107 = vadd.s32 %v96, 88
    %v108 = vadd.s32 %v96, 96
    %v109 = vadd.s32 %v96, 104
    %v110 = vadd.s32 %v96, 112
    %v111 = vadd.s32 %v96, 120
    %v112 = vlaneseq
    %v113 = vshrl.u32 %v112, 7
    %v114 = vsub.s32 0, %v113
    %v115 = vrot.slane %v78, %v114
    %vm116 = vcmp.eq.s32.totalorder %v96, %v115
    %vm117 = vcmp.eq.s32.totalorder %v97, %v115
    %vm118 = vcmp.eq.s32.totalorder %v98, %v115
    %vm119 = vcmp.eq.s32.totalorder %v99, %v115
    %vm120 = vcmp.eq.s32.totalorder %v100, %v115
    %vm121 = vcmp.eq.s32.totalorder %v101, %v115
    %vm122 = vcmp.eq.s32.totalorder %v102, %v115
    %vm123 = vcmp.eq.s32.totalorder %v103, %v115
    %vm124 = vcmp.eq.s32.totalorder %v104, %v115
    %vm125 = vcmp.eq.s32.totalorder %v105, %v115
    %vm126 = vcmp.eq.s32.totalorder %v106, %v115
    %vm127 = vcmp.eq.s32.totalorder %v107, %v115
    %vm128 = vcmp.eq.s32.totalorder %v108, %v115
    %vm129 = vcmp.eq.s32.totalorder %v109, %v115
    %vm130 = vcmp.eq.s32.totalorder %v110, %v115
    %vm131 = vcmp.eq.s32.totalorder %v111, %v115
    %v132 = vsel %vm116, 1, 0
    %v133 = vsel %vm117, 1, 0
    %v134 = vsel %vm118, 1, 0
    %v135 = vsel %vm119, 1, 0
    %v136 = vsel %vm120, 1, 0
    %v137 = vsel %vm121, 1, 0
    %v138 = vsel %vm122, 1, 0
    %v139 = vsel %vm123, 1, 0
    %v140 = vsel %vm124, 1, 0
    %v141 = vsel %vm125, 1, 0
    %v142 = vsel %vm126, 1, 0
    %v143 = vsel %vm127, 1, 0
    %v144 = vsel %vm128, 1, 0
    %v145 = vsel %vm129, 1, 0
    %v146 = vsel %vm130, 1, 0
    %v147 = vsel %vm131, 1, 0
    %v148 = vcvt.s32.f32 %v132
    %v149 = vcvt.s32.f32 %v133
    %v150 = vcvt.s32.f32 %v134
    %v151 = vcvt.s32.f32 %v135
    %v152 = vcvt.s32.f32 %v136
    %v153 = vcvt.s32.f32 %v137
    %v154 = vcvt.s32.f32 %v138
    %v155 = vcvt.s32.f32 %v139
    %v156 = vcvt.s32.f32 %v140
    %v157 = vcvt.s32.f32 %v141
    %v158 = vcvt.s32.f32 %v142
    %v159 = vcvt.s32.f32 %v143
    %v160 = vcvt.s32.f32 %v144
    %v161 = vcvt.s32.f32 %v145
    %v162 = vcvt.s32.f32 %v146
    %v163 = vcvt.s32.f32 %v147
    %v164 = vpack.c.bf16 %v149, %v148
    %v165 = vpack.c.bf16 %v151, %v150
    %v166 = vpack.c.bf16 %v153, %v152
    %v167 = vpack.c.bf16 %v155, %v154
    %v168 = vpack.c.bf16 %v157, %v156
    %v169 = vpack.c.bf16 %v159, %v158
    %v170 = vpack.c.bf16 %v161, %v160
    %v171 = vpack.c.bf16 %v163, %v162
    %172 = vxpose.xlu0.c.b16.start [1/8] %v164, 128
    %173 = vxpose.xlu0.c.b16.cont [2/8] %v165, 128
    %174 = vxpose.xlu0.c.b16.cont [3/8] %v166, 128
    %175 = vxpose.xlu0.c.b16.cont [4/8] %v167, 128
    %176 = vxpose.xlu0.c.b16.cont [5/8] %v168, 128
    %177 = vxpose.xlu0.c.b16.cont [6/8] %v169, 128
    %178 = vxpose.xlu0.c.b16.cont [7/8] %v170, 128
    %179 = vxpose.xlu0.c.b16.end [8/8] %v171, 128
    %v180 = vpop.trf.xlu0
    %v181 = vpop.trf.xlu0
    %v182 = vpop.trf.xlu0
    %v183 = vpop.trf.xlu0
    %v184 = vpop.trf.xlu0
    %v185 = vpop.trf.xlu0
    %v186 = vpop.trf.xlu0
    %v187 = vpop.trf.xlu0
    %v204 = vunpack.c.l.b16 %v79
    %v205 = vunpack.c.l.b16 %v80
    %v206 = vunpack.c.l.b16 %v81
    %v207 = vunpack.c.l.b16 %v82
    %v208 = vunpack.c.l.b16 %v83
    %v209 = vunpack.c.l.b16 %v84
    %v210 = vunpack.c.l.b16 %v85
    %v211 = vunpack.c.l.b16 %v86
    %v212 = vunpack.c.l.b16 %v87
    %v213 = vunpack.c.l.b16 %v88
    %v214 = vunpack.c.l.b16 %v89
    %v215 = vunpack.c.l.b16 %v90
    %v216 = vunpack.c.l.b16 %v91
    %v217 = vunpack.c.l.b16 %v92
    %v218 = vunpack.c.l.b16 %v93
    %v219 = vunpack.c.l.b16 %v94
    %v220 = vpack.c.b16 %v205, %v204
    %v221 = vpack.c.b16 %v207, %v206
    %v222 = vpack.c.b16 %v209, %v208
    %v223 = vpack.c.b16 %v211, %v210
    %v224 = vpack.c.b16 %v213, %v212
    %v225 = vpack.c.b16 %v215, %v214
    %v226 = vpack.c.b16 %v217, %v216
    %v227 = vpack.c.b16 %v219, %v218
    %236 = vmatprep.subr.bf16.mxu0 0
    %237 = vmatpush1.bf16.msra.mxu0 %v227
    %238 = vmatprep.subr.bf16.mxu0 0
    %239 = vmatpush1.bf16.msra.mxu0 %v226
    %240 = vmatprep.subr.bf16.mxu0 0
    %241 = vmatpush1.bf16.msra.mxu0 %v225
    %242 = vmatprep.subr.bf16.mxu0 0
    %243 = vmatpush1.bf16.msra.mxu0 %v224
    %244 = vmatprep.subr.bf16.mxu0 0
    %245 = vmatpush1.bf16.msra.mxu0 %v223
    %246 = vmatprep.subr.bf16.mxu0 0
    %247 = vmatpush1.bf16.msra.mxu0 %v222
    %248 = vmatprep.subr.bf16.mxu0 0
    %249 = vmatpush1.bf16.msra.mxu0 %v221
    %250 = vmatprep.subr.bf16.mxu0 0
    %251 = vmatpush1.bf16.msra.mxu0 %v220
    %252 = vmatprep.subr.bf16.mxu0 0
    %253 = vmatpush2.bf16.msra.mxu0 0
    %254 = vmatprep.subr.bf16.mxu0 0
    %255 = vmatpush2.bf16.msra.mxu0 0
    %256 = vmatprep.subr.bf16.mxu0 0
    %257 = vmatpush2.bf16.msra.mxu0 0
    %258 = vmatprep.subr.bf16.mxu0 0
    %259 = vmatpush2.bf16.msra.mxu0 0
    %260 = vmatprep.subr.bf16.mxu0 0
    %261 = vmatpush2.bf16.msra.mxu0 0
    %262 = vmatprep.subr.bf16.mxu0 0
    %263 = vmatpush2.bf16.msra.mxu0 0
    %264 = vmatprep.subr.bf16.mxu0 0
    %265 = vmatpush2.bf16.msra.mxu0 0
    %266 = vmatprep.subr.bf16.mxu0 0
    %267 = vmatpush2.bf16.msra.mxu0 0
    %268 = vmatprep.mubr.bf16.mxu0 0
    %269 = vmatmul.mubr.bf16.gmra.mxu0 %v180
    %v270 = vpop.f32.mrf.mxu0
    %v271 = vadd.f32 0.0, %v270
    %v272 = vpop.f32.mrf.mxu0
    %v273 = vpop.f32.mrf.mxu0
    %v274 = vadd.f32 0.0, %v273
    %v275 = vpop.f32.mrf.mxu0
    %276 = vdwg.mxu0
    %v277 = vpack.c.bf16 %v274, %v271
    %v278 = vld [vmem:[%s3] sm:$0x1]
    %v279 = vld [vmem:[#allocation7] sm:$0xf]
    %v280 = vld [vmem:[#allocation7 + $0x4] sm:$0xf]
    %v281 = vld [vmem:[#allocation7 + $0x8] sm:$0xf]
    %v282 = vld [vmem:[#allocation7 + $0xc] sm:$0xf]
    %v283 = vld [vmem:[#allocation7 + $0x10] sm:$0xf]
    %v284 = vld [vmem:[#allocation7 + $0x14] sm:$0xf]
    %v285 = vld [vmem:[#allocation7 + $0x18] sm:$0xf]
    %v286 = vld [vmem:[#allocation7 + $0x1c] sm:$0xf]
    %v287 = vld [vmem:[#allocation7 + $0x20] sm:$0xf]
    %v288 = vld [vmem:[#allocation7 + $0x24] sm:$0xf]
    %v289 = vld [vmem:[#allocation7 + $0x28] sm:$0xf]
    %v290 = vld [vmem:[#allocation7 + $0x2c] sm:$0xf]
    %v291 = vld [vmem:[#allocation7 + $0x30] sm:$0xf]
    %v292 = vld [vmem:[#allocation7 + $0x34] sm:$0xf]
    %v293 = vld [vmem:[#allocation7 + $0x38] sm:$0xf]
    %v294 = vld [vmem:[#allocation7 + $0x3c] sm:$0xf]
    %v311 = vunpack.c.l.b16 %v279
    %v312 = vunpack.c.l.b16 %v280
    %v313 = vunpack.c.l.b16 %v281
    %v314 = vunpack.c.l.b16 %v282
    %v315 = vunpack.c.l.b16 %v283
    %v316 = vunpack.c.l.b16 %v284
    %v317 = vunpack.c.l.b16 %v285
    %v318 = vunpack.c.l.b16 %v286
    %v319 = vunpack.c.l.b16 %v287
    %v320 = vunpack.c.l.b16 %v288
    %v321 = vunpack.c.l.b16 %v289
    %v322 = vunpack.c.l.b16 %v290
    %v323 = vunpack.c.l.b16 %v291
    %v324 = vunpack.c.l.b16 %v292
    %v325 = vunpack.c.l.b16 %v293
    %v326 = vunpack.c.l.b16 %v294
    %v327 = vpack.c.b16 %v312, %v311
    %v328 = vpack.c.b16 %v314, %v313
    %v329 = vpack.c.b16 %v316, %v315
    %v330 = vpack.c.b16 %v318, %v317
    %v331 = vpack.c.b16 %v320, %v319
    %v332 = vpack.c.b16 %v322, %v321
    %v333 = vpack.c.b16 %v324, %v323
    %v334 = vpack.c.b16 %v326, %v325
    %343 = vmatprep.subr.bf16.mxu0 0
    %344 = vmatpush1.bf16.msra.mxu0 %v334
    %345 = vmatprep.subr.bf16.mxu0 0
    %346 = vmatpush1.bf16.msra.mxu0 %v333
    %347 = vmatprep.subr.bf16.mxu0 0
    %348 = vmatpush1.bf16.msra.mxu0 %v332
    %349 = vmatprep.subr.bf16.mxu0 0
    %350 = vmatpush1.bf16.msra.mxu0 %v331
    %351 = vmatprep.subr.bf16.mxu0 0
    %352 = vmatpush1.bf16.msra.mxu0 %v330
    %353 = vmatprep.subr.bf16.mxu0 0
    %354 = vmatpush1.bf16.msra.mxu0 %v329
    %355 = vmatprep.subr.bf16.mxu0 0
    %356 = vmatpush1.bf16.msra.mxu0 %v328
    %357 = vmatprep.subr.bf16.mxu0 0
    %358 = vmatpush1.bf16.msra.mxu0 %v327
    %359 = vmatprep.subr.bf16.mxu0 0
    %360 = vmatpush2.bf16.msra.mxu0 0
    %361 = vmatprep.subr.bf16.mxu0 0
    %362 = vmatpush2.bf16.msra.mxu0 0
    %363 = vmatprep.subr.bf16.mxu0 0
    %364 = vmatpush2.bf16.msra.mxu0 0
    %365 = vmatprep.subr.bf16.mxu0 0
    %366 = vmatpush2.bf16.msra.mxu0 0
    %367 = vmatprep.subr.bf16.mxu0 0
    %368 = vmatpush2.bf16.msra.mxu0 0
    %369 = vmatprep.subr.bf16.mxu0 0
    %370 = vmatpush2.bf16.msra.mxu0 0
    %371 = vmatprep.subr.bf16.mxu0 0
    %372 = vmatpush2.bf16.msra.mxu0 0
    %373 = vmatprep.subr.bf16.mxu0 0
    %374 = vmatpush2.bf16.msra.mxu0 0
    %375 = vmatprep.mubr.bf16.mxu0 0
    %376 = vmatmul.mubr.bf16.gmra.mxu0 %v277
    %v377 = vpop.f32.mrf.mxu0
    %v378 = vadd.f32 0.0, %v377
    %v379 = vpop.f32.mrf.mxu0
    %v380 = vpop.f32.mrf.mxu0
    %v381 = vadd.f32 0.0, %v380
    %v382 = vpop.f32.mrf.mxu0
    %383 = vdwg.mxu0
    %v385 = vlaneseq
    %v386 = vshrl.u32 %v385, 7
    %v387 = vsub.s32 0, %v386
    %v388 = vrot.slane %v278, %v387
    %v390 = vadd.f32 %v388, %v378
    %v391 = vadd.f32 %v388, %v381
    %v392 = vand.u32 2147483647, %v390
    %v393 = vand.u32 2147483647, %v391
    %v394 = vsub.f32 0.0, %v392
    %v395 = vsub.f32 0.0, %v393
    %v396 = vmul.f32 %v394, 1.442695
    %v397 = vpow.pop %v396
    %v398 = vmul.f32 %v395, 1.442695
    %v399 = vpow.pop %v398
    %v400 = vadd.f32 %v397, 1.0
    %v401 = vlog2.pop %v400
    %v402 = vmul.f32 %v401, 0.6931472
    %v403 = vmul.f32 -0.5, %v397
    %v404 = vadd.f32 %v403, 1.0
    %v405 = vmul.f32 %v404, %v397
    %v406 = vand.u32 2147483647, %v397
    %vm407 = vcmp.lt.f32.partialorder %v406, 0.0004427343
    %v408 = vsel %vm407, %v405, %v402
    %v409 = vadd.f32 %v399, 1.0
    %v410 = vlog2.pop %v409
    %v411 = vmul.f32 %v410, 0.6931472
    %v412 = vmul.f32 -0.5, %v399
    %v413 = vadd.f32 %v412, 1.0
    %v414 = vmul.f32 %v413, %v399
    %v415 = vand.u32 2147483647, %v399
    %vm416 = vcmp.lt.f32.partialorder %v415, 0.0004427343
    %v417 = vsel %vm416, %v414, %v411
    %v418 = vmax.f32 %v390, 0.0
    %v419 = vmax.f32 %v391, 0.0
    %v420 = vadd.f32 %v408, %v418
    %v421 = vadd.f32 %v417, %v419
    %v422 = vtanh.pop %v420
    %v423 = vtanh.pop %v421
    %v424 = vmul.f32 %v390, %v422
    %v425 = vmul.f32 %v391, %v423
    %v426 = vld [vmem:[%s5] sm:$0x1]
    %v427 = vpack.c.bf16 %v425, %v424
    %v428 = vld [vmem:[#allocation8] sm:$0xf]
    %v429 = vld [vmem:[#allocation8 + $0x4] sm:$0xf]
    %v430 = vld [vmem:[#allocation8 + $0x8] sm:$0xf]
    %v431 = vld [vmem:[#allocation8 + $0xc] sm:$0xf]
    %v432 = vld [vmem:[#allocation8 + $0x10] sm:$0xf]
    %v433 = vld [vmem:[#allocation8 + $0x14] sm:$0xf]
    %v434 = vld [vmem:[#allocation8 + $0x18] sm:$0xf]
    %v435 = vld [vmem:[#allocation8 + $0x1c] sm:$0xf]
    %v436 = vld [vmem:[#allocation8 + $0x20] sm:$0xf]
    %v437 = vld [vmem:[#allocation8 + $0x24] sm:$0xf]
    %v438 = vld [vmem:[#allocation8 + $0x28] sm:$0xf]
    %v439 = vld [vmem:[#allocation8 + $0x2c] sm:$0xf]
    %v440 = vld [vmem:[#allocation8 + $0x30] sm:$0xf]
    %v441 = vld [vmem:[#allocation8 + $0x34] sm:$0xf]
    %v442 = vld [vmem:[#allocation8 + $0x38] sm:$0xf]
    %v443 = vld [vmem:[#allocation8 + $0x3c] sm:$0xf]
    %v460 = vunpack.c.l.b16 %v428
    %v461 = vunpack.c.l.b16 %v429
    %v462 = vunpack.c.l.b16 %v430
    %v463 = vunpack.c.l.b16 %v431
    %v464 = vunpack.c.l.b16 %v432
    %v465 = vunpack.c.l.b16 %v433
    %v466 = vunpack.c.l.b16 %v434
    %v467 = vunpack.c.l.b16 %v435
    %v468 = vunpack.c.l.b16 %v436
    %v469 = vunpack.c.l.b16 %v437
    %v470 = vunpack.c.l.b16 %v438
    %v471 = vunpack.c.l.b16 %v439
    %v472 = vunpack.c.l.b16 %v440
    %v473 = vunpack.c.l.b16 %v441
    %v474 = vunpack.c.l.b16 %v442
    %v475 = vunpack.c.l.b16 %v443
    %v476 = vpack.c.b16 %v461, %v460
    %v477 = vpack.c.b16 %v463, %v462
    %v478 = vpack.c.b16 %v465, %v464
    %v479 = vpack.c.b16 %v467, %v466
    %v480 = vpack.c.b16 %v469, %v468
    %v481 = vpack.c.b16 %v471, %v470
    %v482 = vpack.c.b16 %v473, %v472
    %v483 = vpack.c.b16 %v475, %v474
    %492 = vmatprep.subr.bf16.mxu0 0
    %493 = vmatpush1.bf16.msra.mxu0 %v483
    %494 = vmatprep.subr.bf16.mxu0 0
    %495 = vmatpush1.bf16.msra.mxu0 %v482
    %496 = vmatprep.subr.bf16.mxu0 0
    %497 = vmatpush1.bf16.msra.mxu0 %v481
    %498 = vmatprep.subr.bf16.mxu0 0
    %499 = vmatpush1.bf16.msra.mxu0 %v480
    %500 = vmatprep.subr.bf16.mxu0 0
    %501 = vmatpush1.bf16.msra.mxu0 %v479
    %502 = vmatprep.subr.bf16.mxu0 0
    %503 = vmatpush1.bf16.msra.mxu0 %v478
    %504 = vmatprep.subr.bf16.mxu0 0
    %505 = vmatpush1.bf16.msra.mxu0 %v477
    %506 = vmatprep.subr.bf16.mxu0 0
    %507 = vmatpush1.bf16.msra.mxu0 %v476
    %508 = vmatprep.subr.bf16.mxu0 0
    %509 = vmatpush2.bf16.msra.mxu0 0
    %510 = vmatprep.subr.bf16.mxu0 0
    %511 = vmatpush2.bf16.msra.mxu0 0
    %512 = vmatprep.subr.bf16.mxu0 0
    %513 = vmatpush2.bf16.msra.mxu0 0
    %514 = vmatprep.subr.bf16.mxu0 0
    %515 = vmatpush2.bf16.msra.mxu0 0
    %516 = vmatprep.subr.bf16.mxu0 0
    %517 = vmatpush2.bf16.msra.mxu0 0
    %518 = vmatprep.subr.bf16.mxu0 0
    %519 = vmatpush2.bf16.msra.mxu0 0
    %520 = vmatprep.subr.bf16.mxu0 0
    %521 = vmatpush2.bf16.msra.mxu0 0
    %522 = vmatprep.subr.bf16.mxu0 0
    %523 = vmatpush2.bf16.msra.mxu0 0
    %524 = vmatprep.mubr.bf16.mxu0 0
    %525 = vmatmul.mubr.bf16.gmra.mxu0 %v427
    %v526 = vpop.f32.mrf.mxu0
    %v527 = vadd.f32 0.0, %v526
    %v528 = vpop.f32.mrf.mxu0
    %v529 = vpop.f32.mrf.mxu0
    %v530 = vadd.f32 0.0, %v529
    %v531 = vpop.f32.mrf.mxu0
    %532 = vdwg.mxu0
    %v534 = vlaneseq
    %v535 = vshrl.u32 %v534, 7
    %v536 = vsub.s32 0, %v535
    %v537 = vrot.slane %v426, %v536
    %v539 = vadd.f32 %v537, %v527
    %v540 = vadd.f32 %v537, %v530
    %v541 = vadd.f32 %v271, %v539
    %v542 = vadd.f32 %v274, %v540
    %v543 = vpack.c.bf16 %v542, %v541
    %v545 = vunpack.c.l.b16 %v543
    %v546 = vunpack.c.h.b16 %v543
    %v547 = vpack.c.b16 %v545, %v545
    %v548 = vpack.c.b16 %v546, %v546
    %551 = vst [vmem:[#allocation10] sm:$0xf] %v547
    %552 = vst [vmem:[#allocation10 + $0x4] sm:$0xf] %v548
    // Predicated region
    $region42: #{tpu_custom_call.1} parent=1 // pred_check
      _
    $region43: #{tpu_custom_call.1} parent=1 // pred_check_branch
      %554 = sbr.rel (0) target = $region45
    $region44: #{tpu_custom_call.1} parent=1 // pred_region
      %s556 = ssub.s32 128, 128
      %557 = vsyncadd [#allocation4], %s556
      %s558 = sshll.u32 [#allocation10], 4
      %s559 = int_to_ptr.vmem [resolvable:$true] %s558
      %564 = dma.vmem_to_hbm [thread:$0]  %s559, 128, %s6, [#allocation4], 64, 64, 4
    $region45: #{tpu_custom_call.1} parent=1 // pred_fallthru
      _
    // Predicated region
    $region46: #{tpu_custom_call.1} parent=1 // pred_check
      _
    $region47: #{tpu_custom_call.1} parent=1 // pred_check_branch
      %566 = sbr.rel (0) target = $region49
    $region48: #{tpu_custom_call.1} parent=1 // pred_region
      %567 = dma.done [#allocation4], 128
    $region49: #{tpu_custom_call.1} parent=1 // pred_fallthru
      _
    %568 = vsyncpa [#allocation3], 1
    %569 = vsyncpa [#allocation6], 1
    %570 = vsyncpa [#allocation9], 1
    %571 = vsyncpa [#allocation4], 1

// kernel: tpu_custom_call.1
$region0: #{tpu_custom_call.1}
  #allocation0 [shape = 'u32[]', space=smem, size = 0x4, offset = 0x4, fixed_abs, tag = 'smem constant byte address 0x4 - core index']
  #allocation1 [shape = 'u32[144,128]{1,0:T(1,128)}', space=vmem, size = 0x12000, scoped, tag = 'internal scratch']
  %s0 = inlined_call_operand.hbm [shape: s32[1,1,16], index: 0, kind: input, shape index: {}]
  %s1 = inlined_call_operand.hbm [shape: bf16[128,128], index: 1, kind: input, shape index: {}]
  %s2 = inlined_call_operand.hbm [shape: bf16[1,128,128], index: 2, kind: input, shape index: {}]
  %s3 = inlined_call_operand.vmem [shape: f32[1,1,128], index: 3, kind: input, shape index: {}]
  %s4 = inlined_call_operand.hbm [shape: bf16[1,128,128], index: 4, kind: input, shape index: {}]
  %s5 = inlined_call_operand.vmem [shape: f32[1,1,128], index: 5, kind: input, shape index: {}]
  %s6 = inlined_call_operand.hbm [shape: bf16[16,128], index: 6, kind: output, shape index: {}]
  %s7 = sld [smem:[#allocation0]]
  $region50: #{tpu_custom_call.1} parent=0
    _
  %s9 = ssub.s32 1, %s7
  %s10 = scalar_select 0, %s9, %s7
  $region1: #{tpu_custom_call.1} parent=0
    #allocation2 [shape = 'u8[512]{0}', space=vmem, size = 0x400, scoped, tag = 'input window, operand 0, single buffered']
    #allocation3 [shape = 's32[1]{0}', space=sflag, size = 0x4, scoped, tag = 'scoped memory for tpu_custom_call.1']
    #allocation4 [shape = 's32[1]{0}', space=sflag, size = 0x4, scoped, tag = 'scoped memory for tpu_custom_call.1']
    #allocation5 [shape = 'u8[32768]{0}', space=vmem, size = 0x8000, scoped, tag = 'input window, operand 1, single buffered']
    #allocation6 [shape = 's32[1]{0}', space=sflag, size = 0x4, scoped, tag = 'scoped memory for tpu_custom_call.1']
    #allocation7 [shape = 'u8[32768]{0}', space=vmem, size = 0x8000, scoped, tag = 'input window, operand 2, single buffered']
    #allocation8 [shape = 'u8[32768]{0}', space=vmem, size = 0x8000, scoped, tag = 'input window, operand 4, single buffered']
    #allocation9 [shape = 's32[1]{0}', space=sflag, size = 0x4, scoped, tag = 'scoped memory for tpu_custom_call.1']
    #allocation10 [shape = 'u8[4096]{0}', space=vmem, size = 0x1000, scoped, tag = 'output window, operand 0, single buffered']
    %11 = vsyncpa [#allocation3], 0
    %12 = vsyncpa [#allocation6], 0
    %13 = vsyncpa [#allocation9], 0
    %14 = vsyncpa [#allocation4], 0
    // Predicated region
    $region2: #{tpu_custom_call.1} parent=1 // pred_check
      _
    $region3: #{tpu_custom_call.1} parent=1 // pred_check_branch
      %16 = sbr.rel (0) target = $region5
    $region4: #{tpu_custom_call.1} parent=1 // pred_region
      %s18 = ssub.s32 16, 16
      %19 = vsyncadd [#allocation3], %s18
      %s21 = sshll.u32 [#allocation2], 4
      %s22 = int_to_ptr.vmem [resolvable:$true] %s21
      %24 = dma.hbm_to_vmem [thread:$0]  %s0, 16, %s22, [#allocation3]
    $region5: #{tpu_custom_call.1} parent=1 // pred_fallthru
      _
    // Predicated region
    $region6: #{tpu_custom_call.1} parent=1 // pred_check
      _
    $region7: #{tpu_custom_call.1} parent=1 // pred_check_branch
      %26 = sbr.rel (0) target = $region9
    $region8: #{tpu_custom_call.1} parent=1 // pred_region
      %s28 = ssub.s32 1024, 1024
      %29 = vsyncadd [#allocation6], %s28
      %s30 = sshll.u32 [#allocation5], 4
      %s31 = int_to_ptr.vmem [resolvable:$true] %s30
      %36 = dma.hbm_to_vmem [thread:$0]  %s1, 1024, %s31, [#allocation6], 64, 64, 4
    $region9: #{tpu_custom_call.1} parent=1 // pred_fallthru
      _
    // Predicated region
    $region10: #{tpu_custom_call.1} parent=1 // pred_check
      _
    $region11: #{tpu_custom_call.1} parent=1 // pred_check_branch
      %38 = sbr.rel (0) target = $region13
    $region12: #{tpu_custom_call.1} parent=1 // pred_region
      %s40 = ssub.s32 1024, 1024
      %41 = vsyncadd [#allocation6], %s40
      %s42 = sshll.u32 [#allocation7], 4
      %s43 = int_to_ptr.vmem [resolvable:$true] %s42
      %48 = dma.hbm_to_vmem [thread:$0]  %s2, 1024, %s43, [#allocation6], 64, 64, 4
    $region13: #{tpu_custom_call.1} parent=1 // pred_fallthru
      _
    // Predicated region
    $region14: #{tpu_custom_call.1} parent=1 // pred_check
      _
    $region15: #{tpu_custom_call.1} parent=1 // pred_check_branch
      %50 = sbr.rel (0) target = $region17
    $region16: #{tpu_custom_call.1} parent=1 // pred_region
      _
    $region17: #{tpu_custom_call.1} parent=1 // pred_fallthru
      _
    // Predicated region
    $region18: #{tpu_custom_call.1} parent=1 // pred_check
      _
    $region19: #{tpu_custom_call.1} parent=1 // pred_check_branch
      %52 = sbr.rel (0) target = $region21
    $region20: #{tpu_custom_call.1} parent=1 // pred_region
      %s54 = ssub.s32 1024, 1024
      %55 = vsyncadd [#allocation9], %s54
      %s56 = sshll.u32 [#allocation8], 4
      %s57 = int_to_ptr.vmem [resolvable:$true] %s56
      %62 = dma.hbm_to_vmem [thread:$0]  %s4, 1024, %s57, [#allocation9], 64, 64, 4
    $region21: #{tpu_custom_call.1} parent=1 // pred_fallthru
      _
    // Predicated region
    $region22: #{tpu_custom_call.1} parent=1 // pred_check
      _
    $region23: #{tpu_custom_call.1} parent=1 // pred_check_branch
      %64 = sbr.rel (0) target = $region25
    $region24: #{tpu_custom_call.1} parent=1 // pred_region
      _
    $region25: #{tpu_custom_call.1} parent=1 // pred_fallthru
      _
    // Predicated region
    $region26: #{tpu_custom_call.1} parent=1 // pred_check
      _
    $region27: #{tpu_custom_call.1} parent=1 // pred_check_branch
      %66 = sbr.rel (0) target = $region29
    $region28: #{tpu_custom_call.1} parent=1 // pred_region
      %67 = dma.done [#allocation3], 16
    $region29: #{tpu_custom_call.1} parent=1 // pred_fallthru
      _
    // Predicated region
    $region30: #{tpu_custom_call.1} parent=1 // pred_check
      _
    $region31: #{tpu_custom_call.1} parent=1 // pred_check_branch
      %69 = sbr.rel (0) target = $region33
    $region32: #{tpu_custom_call.1} parent=1 // pred_region
      %70 = dma.done [#allocation6], 1024
    $region33: #{tpu_custom_call.1} parent=1 // pred_fallthru
      _
    // Predicated region
    $region34: #{tpu_custom_call.1} parent=1 // pred_check
      _
    $region35: #{tpu_custom_call.1} parent=1 // pred_check_branch
      %72 = sbr.rel (0) target = $region37
    $region36: #{tpu_custom_call.1} parent=1 // pred_region
      %73 = dma.done [#allocation6], 1024
    $region37: #{tpu_custom_call.1} parent=1 // pred_fallthru
      _
    // Predicated region
    $region38: #{tpu_custom_call.1} parent=1 // pred_check
      _
    $region39: #{tpu_custom_call.1} parent=1 // pred_check_branch
      %75 = sbr.rel (0) target = $region41
    $region40: #{tpu_custom_call.1} parent=1 // pred_region
      %76 = dma.done [#allocation9], 1024
    $region41: #{tpu_custom_call.1} parent=1 // pred_fallthru
      _
    %v78 = vld [vmem:[#allocation2] sm:$0x1]
    %v79 = vld [vmem:[#allocation5] sm:$0xf]
    %v80 = vld [vmem:[#allocation5 + $0x4] sm:$0xf]
    %v81 = vld [vmem:[#allocation5 + $0x8] sm:$0xf]
    %v82 = vld [vmem:[#allocation5 + $0xc] sm:$0xf]
    %v83 = vld [vmem:[#allocation5 + $0x10] sm:$0xf]
    %v84 = vld [vmem:[#allocation5 + $0x14] sm:$0xf]
    %v85 = vld [vmem:[#allocation5 + $0x18] sm:$0xf]
    %v86 = vld [vmem:[#allocation5 + $0x1c] sm:$0xf]
    %v87 = vld [vmem:[#allocation5 + $0x20] sm:$0xf]
    %v88 = vld [vmem:[#allocation5 + $0x24] sm:$0xf]
    %v89 = vld [vmem:[#allocation5 + $0x28] sm:$0xf]
    %v90 = vld [vmem:[#allocation5 + $0x2c] sm:$0xf]
    %v91 = vld [vmem:[#allocation5 + $0x30] sm:$0xf]
    %v92 = vld [vmem:[#allocation5 + $0x34] sm:$0xf]
    %v93 = vld [vmem:[#allocation5 + $0x38] sm:$0xf]
    %v94 = vld [vmem:[#allocation5 + $0x3c] sm:$0xf]
    %v95 = vlaneseq
    %v96 = vshrl.u32 %v95, 7
    %v97 = vadd.s32 %v96, 8
    %v98 = vadd.s32 %v96, 16
    %v99 = vadd.s32 %v96, 24
    %v100 = vadd.s32 %v96, 32
    %v101 = vadd.s32 %v96, 40
    %v102 = vadd.s32 %v96, 48
    %v103 = vadd.s32 %v96, 56
    %v104 = vadd.s32 %v96, 64
    %v105 = vadd.s32 %v96, 72
    %v106 = vadd.s32 %v96, 80
    %v107 = vadd.s32 %v96, 88
    %v108 = vadd.s32 %v96, 96
    %v109 = vadd.s32 %v96, 104
    %v110 = vadd.s32 %v96, 112
    %v111 = vadd.s32 %v96, 120
    %v112 = vlaneseq
    %v113 = vshrl.u32 %v112, 7
    %v114 = vsub.s32 0, %v113
    %v115 = vrot.slane %v78, %v114
    %vm116 = vcmp.eq.s32.totalorder %v96, %v115
    %vm117 = vcmp.eq.s32.totalorder %v97, %v115
    %vm118 = vcmp.eq.s32.totalorder %v98, %v115
    %vm119 = vcmp.eq.s32.totalorder %v99, %v115
    %vm120 = vcmp.eq.s32.totalorder %v100, %v115
    %vm121 = vcmp.eq.s32.totalorder %v101, %v115
    %vm122 = vcmp.eq.s32.totalorder %v102, %v115
    %vm123 = vcmp.eq.s32.totalorder %v103, %v115
    %vm124 = vcmp.eq.s32.totalorder %v104, %v115
    %vm125 = vcmp.eq.s32.totalorder %v105, %v115
    %vm126 = vcmp.eq.s32.totalorder %v106, %v115
    %vm127 = vcmp.eq.s32.totalorder %v107, %v115
    %vm128 = vcmp.eq.s32.totalorder %v108, %v115
    %vm129 = vcmp.eq.s32.totalorder %v109, %v115
    %vm130 = vcmp.eq.s32.totalorder %v110, %v115
    %vm131 = vcmp.eq.s32.totalorder %v111, %v115
    %v132 = vsel %vm116, 1, 0
    %v133 = vsel %vm117, 1, 0
    %v134 = vsel %vm118, 1, 0
    %v135 = vsel %vm119, 1, 0
    %v136 = vsel %vm120, 1, 0
    %v137 = vsel %vm121, 1, 0
    %v138 = vsel %vm122, 1, 0
    %v139 = vsel %vm123, 1, 0
    %v140 = vsel %vm124, 1, 0
    %v141 = vsel %vm125, 1, 0
    %v142 = vsel %vm126, 1, 0
    %v143 = vsel %vm127, 1, 0
    %v144 = vsel %vm128, 1, 0
    %v145 = vsel %vm129, 1, 0
    %v146 = vsel %vm130, 1, 0
    %v147 = vsel %vm131, 1, 0
    %v148 = vcvt.s32.f32 %v132
    %v149 = vcvt.s32.f32 %v133
    %v150 = vcvt.s32.f32 %v134
    %v151 = vcvt.s32.f32 %v135
    %v152 = vcvt.s32.f32 %v136
    %v153 = vcvt.s32.f32 %v137
    %v154 = vcvt.s32.f32 %v138
    %v155 = vcvt.s32.f32 %v139
    %v156 = vcvt.s32.f32 %v140
    %v157 = vcvt.s32.f32 %v141
    %v158 = vcvt.s32.f32 %v142
    %v159 = vcvt.s32.f32 %v143
    %v160 = vcvt.s32.f32 %v144
    %v161 = vcvt.s32.f32 %v145
    %v162 = vcvt.s32.f32 %v146
    %v163 = vcvt.s32.f32 %v147
    %v164 = vpack.c.bf16 %v149, %v148
    %v165 = vpack.c.bf16 %v151, %v150
    %v166 = vpack.c.bf16 %v153, %v152
    %v167 = vpack.c.bf16 %v155, %v154
    %v168 = vpack.c.bf16 %v157, %v156
    %v169 = vpack.c.bf16 %v159, %v158
    %v170 = vpack.c.bf16 %v161, %v160
    %v171 = vpack.c.bf16 %v163, %v162
    %172 = vxpose.xlu0.c.b16.start [1/8] %v164, 128
    %173 = vxpose.xlu0.c.b16.cont [2/8] %v165, 128
    %174 = vxpose.xlu0.c.b16.cont [3/8] %v166, 128
    %175 = vxpose.xlu0.c.b16.cont [4/8] %v167, 128
    %176 = vxpose.xlu0.c.b16.cont [5/8] %v168, 128
    %177 = vxpose.xlu0.c.b16.cont [6/8] %v169, 128
    %178 = vxpose.xlu0.c.b16.cont [7/8] %v170, 128
    %179 = vxpose.xlu0.c.b16.end [8/8] %v171, 128
    %v180 = vpop.trf.xlu0
    %v181 = vpop.trf.xlu0
    %v182 = vpop.trf.xlu0
    %v183 = vpop.trf.xlu0
    %v184 = vpop.trf.xlu0
    %v185 = vpop.trf.xlu0
    %v186 = vpop.trf.xlu0
    %v187 = vpop.trf.xlu0
    %v204 = vunpack.c.l.b16 %v79
    %v205 = vunpack.c.l.b16 %v80
    %v206 = vunpack.c.l.b16 %v81
    %v207 = vunpack.c.l.b16 %v82
    %v208 = vunpack.c.l.b16 %v83
    %v209 = vunpack.c.l.b16 %v84
    %v210 = vunpack.c.l.b16 %v85
    %v211 = vunpack.c.l.b16 %v86
    %v212 = vunpack.c.l.b16 %v87
    %v213 = vunpack.c.l.b16 %v88
    %v214 = vunpack.c.l.b16 %v89
    %v215 = vunpack.c.l.b16 %v90
    %v216 = vunpack.c.l.b16 %v91
    %v217 = vunpack.c.l.b16 %v92
    %v218 = vunpack.c.l.b16 %v93
    %v219 = vunpack.c.l.b16 %v94
    %v220 = vpack.c.b16 %v205, %v204
    %v221 = vpack.c.b16 %v207, %v206
    %v222 = vpack.c.b16 %v209, %v208
    %v223 = vpack.c.b16 %v211, %v210
    %v224 = vpack.c.b16 %v213, %v212
    %v225 = vpack.c.b16 %v215, %v214
    %v226 = vpack.c.b16 %v217, %v216
    %v227 = vpack.c.b16 %v219, %v218
    %236 = vmatprep.subr.bf16.mxu0 0
    %237 = vmatpush1.bf16.msra.mxu0 %v227
    %238 = vmatprep.subr.bf16.mxu0 0
    %239 = vmatpush1.bf16.msra.mxu0 %v226
    %240 = vmatprep.subr.bf16.mxu0 0
    %241 = vmatpush1.bf16.msra.mxu0 %v225
    %242 = vmatprep.subr.bf16.mxu0 0
    %243 = vmatpush1.bf16.msra.mxu0 %v224
    %244 = vmatprep.subr.bf16.mxu0 0
    %245 = vmatpush1.bf16.msra.mxu0 %v223
    %246 = vmatprep.subr.bf16.mxu0 0
    %247 = vmatpush1.bf16.msra.mxu0 %v222
    %248 = vmatprep.subr.bf16.mxu0 0
    %249 = vmatpush1.bf16.msra.mxu0 %v221
    %250 = vmatprep.subr.bf16.mxu0 0
    %251 = vmatpush1.bf16.msra.mxu0 %v220
    %252 = vmatprep.subr.bf16.mxu0 0
    %253 = vmatpush2.bf16.msra.mxu0 0
    %254 = vmatprep.subr.bf16.mxu0 0
    %255 = vmatpush2.bf16.msra.mxu0 0
    %256 = vmatprep.subr.bf16.mxu0 0
    %257 = vmatpush2.bf16.msra.mxu0 0
    %258 = vmatprep.subr.bf16.mxu0 0
    %259 = vmatpush2.bf16.msra.mxu0 0
    %260 = vmatprep.subr.bf16.mxu0 0
    %261 = vmatpush2.bf16.msra.mxu0 0
    %262 = vmatprep.subr.bf16.mxu0 0
    %263 = vmatpush2.bf16.msra.mxu0 0
    %264 = vmatprep.subr.bf16.mxu0 0
    %265 = vmatpush2.bf16.msra.mxu0 0
    %266 = vmatprep.subr.bf16.mxu0 0
    %267 = vmatpush2.bf16.msra.mxu0 0
    %268 = vmatprep.mubr.bf16.mxu0 0
    %269 = vmatmul.mubr.bf16.gmra.mxu0 %v180
    %v270 = vpop.f32.mrf.mxu0
    %v271 = vadd.f32 0.0, %v270
    %v272 = vpop.f32.mrf.mxu0
    %v273 = vpop.f32.mrf.mxu0
    %v274 = vadd.f32 0.0, %v273
    %v275 = vpop.f32.mrf.mxu0
    %276 = vdwg.mxu0
    %v277 = vpack.c.bf16 %v274, %v271
    %v278 = vld [vmem:[%s3] sm:$0x1]
    %v279 = vld [vmem:[#allocation7] sm:$0xf]
    %v280 = vld [vmem:[#allocation7 + $0x4] sm:$0xf]
    %v281 = vld [vmem:[#allocation7 + $0x8] sm:$0xf]
    %v282 = vld [vmem:[#allocation7 + $0xc] sm:$0xf]
    %v283 = vld [vmem:[#allocation7 + $0x10] sm:$0xf]
    %v284 = vld [vmem:[#allocation7 + $0x14] sm:$0xf]
    %v285 = vld [vmem:[#allocation7 + $0x18] sm:$0xf]
    %v286 = vld [vmem:[#allocation7 + $0x1c] sm:$0xf]
    %v287 = vld [vmem:[#allocation7 + $0x20] sm:$0xf]
    %v288 = vld [vmem:[#allocation7 + $0x24] sm:$0xf]
    %v289 = vld [vmem:[#allocation7 + $0x28] sm:$0xf]
    %v290 = vld [vmem:[#allocation7 + $0x2c] sm:$0xf]
    %v291 = vld [vmem:[#allocation7 + $0x30] sm:$0xf]
    %v292 = vld [vmem:[#allocation7 + $0x34] sm:$0xf]
    %v293 = vld [vmem:[#allocation7 + $0x38] sm:$0xf]
    %v294 = vld [vmem:[#allocation7 + $0x3c] sm:$0xf]
    %v311 = vunpack.c.l.b16 %v279
    %v312 = vunpack.c.l.b16 %v280
    %v313 = vunpack.c.l.b16 %v281
    %v314 = vunpack.c.l.b16 %v282
    %v315 = vunpack.c.l.b16 %v283
    %v316 = vunpack.c.l.b16 %v284
    %v317 = vunpack.c.l.b16 %v285
    %v318 = vunpack.c.l.b16 %v286
    %v319 = vunpack.c.l.b16 %v287
    %v320 = vunpack.c.l.b16 %v288
    %v321 = vunpack.c.l.b16 %v289
    %v322 = vunpack.c.l.b16 %v290
    %v323 = vunpack.c.l.b16 %v291
    %v324 = vunpack.c.l.b16 %v292
    %v325 = vunpack.c.l.b16 %v293
    %v326 = vunpack.c.l.b16 %v294
    %v327 = vpack.c.b16 %v312, %v311
    %v328 = vpack.c.b16 %v314, %v313
    %v329 = vpack.c.b16 %v316, %v315
    %v330 = vpack.c.b16 %v318, %v317
    %v331 = vpack.c.b16 %v320, %v319
    %v332 = vpack.c.b16 %v322, %v321
    %v333 = vpack.c.b16 %v324, %v323
    %v334 = vpack.c.b16 %v326, %v325
    %343 = vmatprep.subr.bf16.mxu0 0
    %344 = vmatpush1.bf16.msra.mxu0 %v334
    %345 = vmatprep.subr.bf16.mxu0 0
    %346 = vmatpush1.bf16.msra.mxu0 %v333
    %347 = vmatprep.subr.bf16.mxu0 0
    %348 = vmatpush1.bf16.msra.mxu0 %v332
    %349 = vmatprep.subr.bf16.mxu0 0
    %350 = vmatpush1.bf16.msra.mxu0 %v331
    %351 = vmatprep.subr.bf16.mxu0 0
    %352 = vmatpush1.bf16.msra.mxu0 %v330
    %353 = vmatprep.subr.bf16.mxu0 0
    %354 = vmatpush1.bf16.msra.mxu0 %v329
    %355 = vmatprep.subr.bf16.mxu0 0
    %356 = vmatpush1.bf16.msra.mxu0 %v328
    %357 = vmatprep.subr.bf16.mxu0 0
    %358 = vmatpush1.bf16.msra.mxu0 %v327
    %359 = vmatprep.subr.bf16.mxu0 0
    %360 = vmatpush2.bf16.msra.mxu0 0
    %361 = vmatprep.subr.bf16.mxu0 0
    %362 = vmatpush2.bf16.msra.mxu0 0
    %363 = vmatprep.subr.bf16.mxu0 0
    %364 = vmatpush2.bf16.msra.mxu0 0
    %365 = vmatprep.subr.bf16.mxu0 0
    %366 = vmatpush2.bf16.msra.mxu0 0
    %367 = vmatprep.subr.bf16.mxu0 0
    %368 = vmatpush2.bf16.msra.mxu0 0
    %369 = vmatprep.subr.bf16.mxu0 0
    %370 = vmatpush2.bf16.msra.mxu0 0
    %371 = vmatprep.subr.bf16.mxu0 0
    %372 = vmatpush2.bf16.msra.mxu0 0
    %373 = vmatprep.subr.bf16.mxu0 0
    %374 = vmatpush2.bf16.msra.mxu0 0
    %375 = vmatprep.mubr.bf16.mxu0 0
    %376 = vmatmul.mubr.bf16.gmra.mxu0 %v277
    %v377 = vpop.f32.mrf.mxu0
    %v378 = vadd.f32 0.0, %v377
    %v379 = vpop.f32.mrf.mxu0
    %v380 = vpop.f32.mrf.mxu0
    %v381 = vadd.f32 0.0, %v380
    %v382 = vpop.f32.mrf.mxu0
    %383 = vdwg.mxu0
    %v385 = vlaneseq
    %v386 = vshrl.u32 %v385, 7
    %v387 = vsub.s32 0, %v386
    %v388 = vrot.slane %v278, %v387
    %v390 = vadd.f32 %v388, %v378
    %v391 = vadd.f32 %v388, %v381
    %v392 = vand.u32 2147483647, %v390
    %v393 = vand.u32 2147483647, %v391
    %v394 = vsub.f32 0.0, %v392
    %v395 = vsub.f32 0.0, %v393
    %v396 = vmul.f32 %v394, 1.442695
    %v397 = vpow.pop %v396
    %v398 = vmul.f32 %v395, 1.442695
    %v399 = vpow.pop %v398
    %v400 = vadd.f32 %v397, 1.0
    %v401 = vlog2.pop %v400
    %v402 = vmul.f32 %v401, 0.6931472
    %v403 = vmul.f32 -0.5, %v397
    %v404 = vadd.f32 %v403, 1.0
    %v405 = vmul.f32 %v404, %v397
    %v406 = vand.u32 2147483647, %v397
    %vm407 = vcmp.lt.f32.partialorder %v406, 0.0004427343
    %v408 = vsel %vm407, %v405, %v402
    %v409 = vadd.f32 %v399, 1.0
    %v410 = vlog2.pop %v409
    %v411 = vmul.f32 %v410, 0.6931472
    %v412 = vmul.f32 -0.5, %v399
    %v413 = vadd.f32 %v412, 1.0
    %v414 = vmul.f32 %v413, %v399
    %v415 = vand.u32 2147483647, %v399
    %vm416 = vcmp.lt.f32.partialorder %v415, 0.0004427343
    %v417 = vsel %vm416, %v414, %v411
    %v418 = vmax.f32 %v390, 0.0
    %v419 = vmax.f32 %v391, 0.0
    %v420 = vadd.f32 %v408, %v418
    %v421 = vadd.f32 %v417, %v419
    %v422 = vtanh.pop %v420
    %v423 = vtanh.pop %v421
    %v424 = vmul.f32 %v390, %v422
    %v425 = vmul.f32 %v391, %v423
    %v426 = vld [vmem:[%s5] sm:$0x1]
    %v427 = vpack.c.bf16 %v425, %v424
    %v428 = vld [vmem:[#allocation8] sm:$0xf]
    %v429 = vld [vmem:[#allocation8 + $0x4] sm:$0xf]
    %v430 = vld [vmem:[#allocation8 + $0x8] sm:$0xf]
    %v431 = vld [vmem:[#allocation8 + $0xc] sm:$0xf]
    %v432 = vld [vmem:[#allocation8 + $0x10] sm:$0xf]
    %v433 = vld [vmem:[#allocation8 + $0x14] sm:$0xf]
    %v434 = vld [vmem:[#allocation8 + $0x18] sm:$0xf]
    %v435 = vld [vmem:[#allocation8 + $0x1c] sm:$0xf]
    %v436 = vld [vmem:[#allocation8 + $0x20] sm:$0xf]
    %v437 = vld [vmem:[#allocation8 + $0x24] sm:$0xf]
    %v438 = vld [vmem:[#allocation8 + $0x28] sm:$0xf]
    %v439 = vld [vmem:[#allocation8 + $0x2c] sm:$0xf]
    %v440 = vld [vmem:[#allocation8 + $0x30] sm:$0xf]
    %v441 = vld [vmem:[#allocation8 + $0x34] sm:$0xf]
    %v442 = vld [vmem:[#allocation8 + $0x38] sm:$0xf]
    %v443 = vld [vmem:[#allocation8 + $0x3c] sm:$0xf]
    %v460 = vunpack.c.l.b16 %v428
    %v461 = vunpack.c.l.b16 %v429
    %v462 = vunpack.c.l.b16 %v430
    %v463 = vunpack.c.l.b16 %v431
    %v464 = vunpack.c.l.b16 %v432
    %v465 = vunpack.c.l.b16 %v433
    %v466 = vunpack.c.l.b16 %v434
    %v467 = vunpack.c.l.b16 %v435
    %v468 = vunpack.c.l.b16 %v436
    %v469 = vunpack.c.l.b16 %v437
    %v470 = vunpack.c.l.b16 %v438
    %v471 = vunpack.c.l.b16 %v439
    %v472 = vunpack.c.l.b16 %v440
    %v473 = vunpack.c.l.b16 %v441
    %v474 = vunpack.c.l.b16 %v442
    %v475 = vunpack.c.l.b16 %v443
    %v476 = vpack.c.b16 %v461, %v460
    %v477 = vpack.c.b16 %v463, %v462
    %v478 = vpack.c.b16 %v465, %v464
    %v479 = vpack.c.b16 %v467, %v466
    %v480 = vpack.c.b16 %v469, %v468
    %v481 = vpack.c.b16 %v471, %v470
    %v482 = vpack.c.b16 %v473, %v472
    %v483 = vpack.c.b16 %v475, %v474
    %492 = vmatprep.subr.bf16.mxu0 0
    %493 = vmatpush1.bf16.msra.mxu0 %v483
    %494 = vmatprep.subr.bf16.mxu0 0
    %495 = vmatpush1.bf16.msra.mxu0 %v482
    %496 = vmatprep.subr.bf16.mxu0 0
    %497 = vmatpush1.bf16.msra.mxu0 %v481
    %498 = vmatprep.subr.bf16.mxu0 0
    %499 = vmatpush1.bf16.msra.mxu0 %v480
    %500 = vmatprep.subr.bf16.mxu0 0
    %501 = vmatpush1.bf16.msra.mxu0 %v479
    %502 = vmatprep.subr.bf16.mxu0 0
    %503 = vmatpush1.bf16.msra.mxu0 %v478
    %504 = vmatprep.subr.bf16.mxu0 0
    %505 = vmatpush1.bf16.msra.mxu0 %v477
    %506 = vmatprep.subr.bf16.mxu0 0
    %507 = vmatpush1.bf16.msra.mxu0 %v476
    %508 = vmatprep.subr.bf16.mxu0 0
    %509 = vmatpush2.bf16.msra.mxu0 0
    %510 = vmatprep.subr.bf16.mxu0 0
    %511 = vmatpush2.bf16.msra.mxu0 0
    %512 = vmatprep.subr.bf16.mxu0 0
    %513 = vmatpush2.bf16.msra.mxu0 0
    %514 = vmatprep.subr.bf16.mxu0 0
    %515 = vmatpush2.bf16.msra.mxu0 0
    %516 = vmatprep.subr.bf16.mxu0 0
    %517 = vmatpush2.bf16.msra.mxu0 0
    %518 = vmatprep.subr.bf16.mxu0 0
    %519 = vmatpush2.bf16.msra.mxu0 0
    %520 = vmatprep.subr.bf16.mxu0 0
    %521 = vmatpush2.bf16.msra.mxu0 0
    %522 = vmatprep.subr.bf16.mxu0 0
    %523 = vmatpush2.bf16.msra.mxu0 0
    %524 = vmatprep.mubr.bf16.mxu0 0
    %525 = vmatmul.mubr.bf16.gmra.mxu0 %v427
    %v526 = vpop.f32.mrf.mxu0
    %v527 = vadd.f32 0.0, %v526
    %v528 = vpop.f32.mrf.mxu0
    %v529 = vpop.f32.mrf.mxu0
    %v530 = vadd.f32 0.0, %v529
    %v531 = vpop.f32.mrf.mxu0
    %532 = vdwg.mxu0
    %v534 = vlaneseq
    %v535 = vshrl.u32 %v534, 7
    %v536 = vsub.s32 0, %v535
    %v537 = vrot.slane %v426, %v536
    %v539 = vadd.f32 %v537, %v527
    %v540 = vadd.f32 %v537, %v530
    %v541 = vadd.f32 %v271, %v539
    %v542 = vadd.f32 %v274, %v540
    %v543 = vpack.c.bf16 %v542, %v541
    %v545 = vunpack.c.l.b16 %v543
    %v546 = vunpack.c.h.b16 %v543
    %v547 = vpack.c.b16 %v545, %v545
    %v548 = vpack.c.b16 %v546, %v546
    %551 = vst [vmem:[#allocation10] sm:$0xf] %v547
    %552 = vst [vmem:[#allocation10 + $0x4] sm:$0xf] %v548
    // Predicated region
    $region42: #{tpu_custom_call.1} parent=1 // pred_check
      _
    $region43: #{tpu_custom_call.1} parent=1 // pred_check_branch
      %554 = sbr.rel (0) target = $region45
    $region44: #{tpu_custom_call.1} parent=1 // pred_region
      %s556 = ssub.s32 128, 128
      %557 = vsyncadd [#allocation4], %s556
      %s558 = sshll.u32 [#allocation10], 4
      %s559 = int_to_ptr.vmem [resolvable:$true] %s558
      %564 = dma.vmem_to_hbm [thread:$0]  %s559, 128, %s6, [#allocation4], 64, 64, 4
    $region45: #{tpu_custom_call.1} parent=1 // pred_fallthru
      _
    // Predicated region
    $region46: #{tpu_custom_call.1} parent=1 // pred_check
      _
    $region47: #{tpu_custom_call.1} parent=1 // pred_check_branch
      %566 = sbr.rel (0) target = $region49
    $region48: #{tpu_custom_call.1} parent=1 // pred_region
      %567 = dma.done [#allocation4], 128
    $region49: #{tpu_custom_call.1} parent=1 // pred_fallthru
      _
    %568 = vsyncpa [#allocation3], 1
    %569 = vsyncpa [#allocation6], 1
    %570 = vsyncpa [#allocation9], 1
    %571 = vsyncpa [#allocation4], 1

</llo_original>
